<compile_context>
chip_gen: v5e
topology: v5e:2x2
jax: 0.10.0
libtpu: 0.0.40
codegen_flags: <defaults>
</compile_context>

<pallas_src>
import functools
import numpy as np

import jax
import jax.numpy as jnp
from jax import lax
from jax.experimental import pallas as pl
from jax.experimental.pallas import tpu as pltpu

START_TAG = "<START>"
STOP_TAG = "<STOP>"
NEG_INF = -10000.0       # the module's own "forbidden transition" value
NEG_PAD = -1.0e30        # sentinel for padded tag lanes/sublanes (never wins a max)


# ----------------------------------------------------------------------------
# Fused kernel: BiLSTM + hidden2tag + Viterbi recursion + backtracking
# ----------------------------------------------------------------------------
def bilstm_crf_kernel(xin_ref, h0_ref, c0_ref, wx_ref, b_ref, whh_ref,
                      w2t_ref, b2t_ref, trans8_ref, tstop_ref,
                      feats_ref, score_ref, path_ref,
                      *, num_tags, start_idx):
    T = xin_ref.shape[0]
    H2 = h0_ref.shape[1]          # hidden_dim = 2 * (hidden_dim // 2)
    Hh = H2 // 2                  # per-direction hidden size
    Kp = trans8_ref.shape[1]      # padded tag lane count (128)
    K = num_tags                  # real tag count (5)

    # ---- (1) hoisted input projection: xin = [x | reverse(x)]  ->  one MXU matmul
    # produces, for step t, the combined-gate pre-activation x[t]@Wih_f + x[T-1-t]@Wih_b + b.
    xcomb = (jnp.dot(xin_ref[...], wx_ref[...], preferred_element_type=jnp.float32)
             + b_ref[...])                                        # (T, 4*H2)

    whh = whh_ref[...]            # (H2, 4*H2) block recurrent weight
    h = h0_ref[...]               # (1, H2) = [h_fwd | h_bwd]
    c = c0_ref[...]               # (1, H2) = [c_fwd | c_bwd]

    # ---- (2) fused fwd+bwd recurrence, fully unrolled; hseq kept in registers
    sub = lax.broadcasted_iota(jnp.int32, (T, H2), 0)
    col = lax.broadcasted_iota(jnp.int32, (T, H2), 1)
    hseq = jnp.zeros((T, H2), jnp.float32)
    for t in range(T):
        tb = T - 1 - t
        gates = xcomb[t:t + 1, :] + jnp.dot(h, whh, preferred_element_type=jnp.float32)
        # PyTorch gate order i, f, g, o; each slice holds [fwd | bwd] halves.
        i = jax.nn.sigmoid(gates[:, 0 * H2:1 * H2])
        f = jax.nn.sigmoid(gates[:, 1 * H2:2 * H2])
        g = jnp.tanh(gates[:, 2 * H2:3 * H2])
        o = jax.nn.sigmoid(gates[:, 3 * H2:4 * H2])
        c = f * c + i * g
        h = o * jnp.tanh(c)
        # place fwd half at row t, bwd half at row T-1-t (register-resident (T,H2))
        h_bc = jnp.broadcast_to(h, (T, H2))
        hseq = jnp.where((sub == t) & (col < Hh), h_bc, hseq)
        hseq = jnp.where((sub == tb) & (col >= Hh), h_bc, hseq)

    # ---- (3) hidden2tag: single [T,H2]@[H2,Kp] matmul, lane-dense feats store
    feats = (jnp.dot(hseq, w2t_ref[...], preferred_element_type=jnp.float32)
             + b2t_ref[...])                                      # (T, Kp)
    feats_ref[...] = feats

    # ---- (4) Viterbi max-plus recursion on a single (8, Kp) vreg
    # trans8[prev, next] = transitions[next, prev]; padded entries = NEG_PAD.
    trans8 = trans8_ref[...]                                      # (8, Kp)
    lane = lax.broadcasted_iota(jnp.int32, (1, Kp), 1)
    sub8 = lax.broadcasted_iota(jnp.int32, (8, Kp), 0)
    lane8 = lax.broadcasted_iota(jnp.int32, (8, Kp), 1)
    diag = sub8 == lane8                                          # picks fv[0, p] into row p

    fv = jnp.where(lane == start_idx, 0.0,
                   jnp.where(lane < K, NEG_INF, NEG_PAD)).astype(jnp.float32)  # (1, Kp)

    bp_rows = []                  # backpointers stay in registers (never leave VMEM/HBM)
    for t in range(T):
        # tiny lane->sublane relayout of fv (<=8 useful values): diag select + lane sum
        fv_col = jnp.sum(jnp.where(diag, jnp.broadcast_to(fv, (8, Kp)), 0.0),
                         axis=1, keepdims=True)                   # (8, 1), fv_col[p]=fv[p]
        # unrolled max/argmax over the K real prev tags (first-occurrence tie-break)
        best_val = fv_col[0:1, :] + trans8[0:1, :]                # (1, Kp)
        best_idx = jnp.zeros((1, Kp), jnp.int32)
        for p in range(1, K):
            cand = fv_col[p:p + 1, :] + trans8[p:p + 1, :]
            upd = cand > best_val
            best_val = jnp.where(upd, cand, best_val)
            best_idx = jnp.where(upd, jnp.int32(p), best_idx)
        bp_rows.append(best_idx)
        fv = best_val + feats[t:t + 1, :]

    terminal = fv + tstop_ref[...]                                # (1, Kp)
    score_ref[...] = jnp.max(terminal, axis=1).reshape(1, 1)
    best_last = jnp.argmax(terminal, axis=1).reshape(1, 1).astype(jnp.int32)

    # ---- (5) backtracking fused on device: one-hot select per step (no host loop)
    chain = [best_last]           # tag at time T-1
    cur = best_last
    for t in range(T - 1, -1, -1):
        oh = lane == cur
        prev = jnp.sum(jnp.where(oh, bp_rows[t].astype(jnp.float32), 0.0),
                       axis=1, keepdims=True).astype(jnp.int32)   # bp_rows[t][cur]
        chain.append(prev)
        cur = prev
    # chain = [tag_{T-1}, ..., tag_0, start_check]; emit lane-dense (1, Kp) path:
    # lanes 0..T-1 = decoded tags in time order, lane T = start-tag sanity value.
    ordered = list(reversed(chain[:-1])) + [chain[-1]]
    path = jnp.zeros((1, Kp), jnp.int32)
    for idx, val in enumerate(ordered):
        path = jnp.where(lane == idx, val, path)
    path_ref[...] = path


# ----------------------------------------------------------------------------
# Wrapper: weight packing (once) + jitted forward (embedding gather + kernel)
# ----------------------------------------------------------------------------
def prepare_params(wih_f, whh_f, bih_f, bhh_f,
                   wih_b, whh_b, bih_b, bhh_b,
                   w2t, b2t, trans, h0, c0, stop_idx, Kp):
    Hh = whh_f.shape[1]
    E = wih_f.shape[1]
    K = trans.shape[0]

    def gate_blocks(w):                      # (4Hh, n) -> 4 x (Hh, n), order i,f,g,o
        return [w[g * Hh:(g + 1) * Hh] for g in range(4)]

    zE = jnp.zeros((Hh, E), jnp.float32)
    zH = jnp.zeros((Hh, Hh), jnp.float32)
    # combined gate layout per gate: [forward Hh | backward Hh]
    Wxf = jnp.concatenate([jnp.concatenate([blk, zE], 0) for blk in gate_blocks(wih_f)], 0)
    Wxb = jnp.concatenate([jnp.concatenate([zE, blk], 0) for blk in gate_blocks(wih_b)], 0)
    wx = jnp.concatenate([Wxf.T, Wxb.T], axis=0)             # (2E, 8Hh): rows = [x | x_rev]
    Whf = jnp.concatenate([jnp.concatenate([blk, zH], 0) for blk in gate_blocks(whh_f)], 0)
    Whb = jnp.concatenate([jnp.concatenate([zH, blk], 0) for blk in gate_blocks(whh_b)], 0)
    whh = jnp.concatenate([Whf.T, Whb.T], axis=0)            # (2Hh, 8Hh)
    bf = bih_f + bhh_f
    bb = bih_b + bhh_b
    bcomb = jnp.concatenate(
        [jnp.concatenate([bf[g * Hh:(g + 1) * Hh], bb[g * Hh:(g + 1) * Hh]])
         for g in range(4)]).reshape(1, 8 * Hh)
    # hidden2tag + transitions; tag lane axis padded to Kp, prev axis padded to 8 sublanes
    w2t_p = jnp.zeros((2 * Hh, Kp), jnp.float32).at[:, :K].set(w2t.T)
    b2t_p = jnp.zeros((1, Kp), jnp.float32).at[0, :K].set(b2t)
    trans8 = jnp.full((8, Kp), NEG_PAD, jnp.float32).at[:K, :K].set(trans.T)
    trans_stop = jnp.full((1, Kp), NEG_PAD, jnp.float32).at[0, :K].set(trans[stop_idx])
    h0c = jnp.concatenate([h0[0:1], h0[1:2]], axis=1)        # (1, 2Hh) = [fwd | bwd]
    c0c = jnp.concatenate([c0[0:1], c0[1:2]], axis=1)
    return h0c, c0c, wx, bcomb, whh, w2t_p, b2t_p, trans8, trans_stop


def make_forward(num_tags, start_idx):
    kern = functools.partial(bilstm_crf_kernel, num_tags=num_tags, start_idx=start_idx)

    @jax.jit
    def forward(sentence, emb, h0c, c0c, wx, bcomb, whh, w2t_p, b2t_p, trans8, trans_stop):
        x = emb[sentence]                         # embedding gather under the same jit
        xin = jnp.concatenate([x, x[::-1]], axis=1)   # (T, 2E): fwd + time-reversed input
        T = x.shape[0]
        Kp = trans8.shape[1]
        vmem = pl.BlockSpec(memory_space=pltpu.MemorySpace.VMEM)
        return pl.pallas_call(
            kern,
            out_shape=(jax.ShapeDtypeStruct((T, Kp), jnp.float32),   # feats (lane-padded)
                       jax.ShapeDtypeStruct((1, 1), jnp.float32),    # viterbi path score
                       jax.ShapeDtypeStruct((1, Kp), jnp.int32)),    # decoded path (+start)
            in_specs=[vmem] * 10,
            out_specs=(vmem, vmem, vmem),
        )(xin, h0c, c0c, wx, bcomb, whh, w2t_p, b2t_p, trans8, trans_stop)

    return forward


# ----------------------------------------------------------------------------
# numpy reference (mirrors PyTorch semantics)
# ----------------------------------------------------------------------------
def _np_sigmoid(x):
    return 1.0 / (1.0 + np.exp(-x))


def _np_lstm_dir(x, h, c, wih, whh, bih, bhh):
    Hh = h.shape[0]
    outs = []
    for t in range(x.shape[0]):
        g = wih @ x[t] + bih + whh @ h + bhh
        i = _np_sigmoid(g[:Hh])
        f = _np_sigmoid(g[Hh:2 * Hh])
        gg = np.tanh(g[2 * Hh:3 * Hh])
        o = _np_sigmoid(g[3 * Hh:4 * Hh])
        c = f * c + i * gg
        h = o * np.tanh(c)
        outs.append(h)
    return np.stack(outs)


if __name__ == "__main__":
    tag_to_ix = {"B": 0, "I": 1, "O": 2, START_TAG: 3, STOP_TAG: 4}
    K = len(tag_to_ix)
    Kp = 128                      # tag axis padded to one full lane tile
    vocab_size = 20
    embedding_dim = 16
    hidden_dim = 32
    Hh = hidden_dim // 2
    T = 8

    key = jax.random.PRNGKey(0)
    ks = jax.random.split(key, 16)

    # deterministic synthetic parameters (shapes follow the nn.Module __init__)
    emb = jax.random.normal(ks[0], (vocab_size, embedding_dim), jnp.float32)
    wih_f = jax.random.normal(ks[1], (4 * Hh, embedding_dim), jnp.float32) * 0.1
    whh_f = jax.random.normal(ks[2], (4 * Hh, Hh), jnp.float32) * 0.1
    bih_f = jax.random.normal(ks[3], (4 * Hh,), jnp.float32) * 0.1
    bhh_f = jax.random.normal(ks[4], (4 * Hh,), jnp.float32) * 0.1
    wih_b = jax.random.normal(ks[5], (4 * Hh, embedding_dim), jnp.float32) * 0.1
    whh_b = jax.random.normal(ks[6], (4 * Hh, Hh), jnp.float32) * 0.1
    bih_b = jax.random.normal(ks[7], (4 * Hh,), jnp.float32) * 0.1
    bhh_b = jax.random.normal(ks[8], (4 * Hh,), jnp.float32) * 0.1
    w2t = jax.random.normal(ks[9], (K, hidden_dim), jnp.float32) * 0.1
    b2t = jax.random.normal(ks[10], (K,), jnp.float32) * 0.1
    trans = jax.random.normal(ks[11], (K, K), jnp.float32)
    trans = trans.at[tag_to_ix[START_TAG], :].set(NEG_INF)
    trans = trans.at[:, tag_to_ix[STOP_TAG]].set(NEG_INF)
    h0 = jax.random.normal(ks[12], (2, Hh), jnp.float32)     # init_hidden() (randn)
    c0 = jax.random.normal(ks[13], (2, Hh), jnp.float32)
    sentence = jax.random.randint(ks[14], (T,), 0, vocab_size)

    packed = prepare_params(wih_f, whh_f, bih_f, bhh_f,
                            wih_b, whh_b, bih_b, bhh_b,
                            w2t, b2t, trans, h0, c0, tag_to_ix[STOP_TAG], Kp)

    forward = make_forward(K, tag_to_ix[START_TAG])
    feats_p, score, path_all = forward(sentence, emb, *packed)
    jax.block_until_ready((feats_p, score, path_all))
    score = float(score[0, 0])
    path_np = np.asarray(path_all)[0]
    best_path = [int(v) for v in path_np[:T]]
    start = int(path_np[T])
    assert start == tag_to_ix[START_TAG]

    # ---------------- correctness check against numpy reference ----------------
    x_np = np.asarray(emb)[np.asarray(sentence)]
    hf_ref = _np_lstm_dir(x_np, np.asarray(h0)[0], np.asarray(c0)[0],
                          np.asarray(wih_f), np.asarray(whh_f),
                          np.asarray(bih_f), np.asarray(bhh_f))
    hb_ref = _np_lstm_dir(x_np[::-1], np.asarray(h0)[1], np.asarray(c0)[1],
                          np.asarray(wih_b), np.asarray(whh_b),
                          np.asarray(bih_b), np.asarray(bhh_b))[::-1]
    feats_ref = np.concatenate([hf_ref, hb_ref], axis=1) @ np.asarray(w2t).T + np.asarray(b2t)
    feats_k = np.asarray(feats_p)[:, :K]
    assert np.allclose(feats_k, feats_ref, atol=1e-3, rtol=1e-3)

    # Viterbi reference (using the kernel feats as input, real K x K transitions)
    trans_np = np.asarray(trans)
    fv = np.full((K,), NEG_INF, np.float32)
    fv[tag_to_ix[START_TAG]] = 0.0
    bps = []
    for t in range(T):
        mat = fv[None, :] + trans_np
        bps.append(np.argmax(mat, axis=1))
        fv = np.max(mat, axis=1) + feats_k[t]
    terminal = fv + trans_np[tag_to_ix[STOP_TAG]]
    best_r = int(np.argmax(terminal))
    score_r = float(terminal[best_r])
    path_r = [best_r]
    bt = best_r
    for bp_t in reversed(bps):
        bt = int(bp_t[bt])
        path_r.append(bt)
    path_r.pop()
    path_r.reverse()

    assert abs(score - score_r) < 1e-2
    assert best_path == path_r

    print("KERNEL_OK")
</pallas_src>

<mosaic_0001>
module attributes {stable_mosaic.version = 11 : i64} {
  func.func @bilstm_crf_kernel(%arg0: memref<8x32xf32, #tpu.memory_space<vmem>>, %arg1: memref<1x32xf32, #tpu.memory_space<vmem>>, %arg2: memref<1x32xf32, #tpu.memory_space<vmem>>, %arg3: memref<32x128xf32, #tpu.memory_space<vmem>>, %arg4: memref<1x128xf32, #tpu.memory_space<vmem>>, %arg5: memref<32x128xf32, #tpu.memory_space<vmem>>, %arg6: memref<32x128xf32, #tpu.memory_space<vmem>>, %arg7: memref<1x128xf32, #tpu.memory_space<vmem>>, %arg8: memref<8x128xf32, #tpu.memory_space<vmem>>, %arg9: memref<1x128xf32, #tpu.memory_space<vmem>>, %arg10: memref<8x128xf32, #tpu.memory_space<vmem>>, %arg11: memref<1x1xf32, #tpu.memory_space<vmem>>, %arg12: memref<1x128xi32, #tpu.memory_space<vmem>>) attributes {dimension_semantics = [], scalar_prefetch = 0 : i64, scratch_operands = 0 : i64, tpu.core_type = #tpu.core_type<tc>} {
    %c0 = arith.constant 0 : index
    %c0_0 = arith.constant 0 : index
    %0 = vector.load %arg0[%c0, %c0_0] : memref<8x32xf32, #tpu.memory_space<vmem>>, vector<8x32xf32>
    %c0_1 = arith.constant 0 : index
    %c0_2 = arith.constant 0 : index
    %1 = vector.load %arg3[%c0_1, %c0_2] : memref<32x128xf32, #tpu.memory_space<vmem>>, vector<32x128xf32>
    %cst = arith.constant dense<0.000000e+00> : vector<8x128xf32>
    %2 = tpu.matmul %0, %1, %cst {dimension_numbers = #tpu.dot_dimension_numbers<[1], [0], [0], [1], [0, 0, 1, 1], [], []>} : vector<8x32xf32>, vector<32x128xf32>, vector<8x128xf32> -> vector<8x128xf32>
    %c0_3 = arith.constant 0 : index
    %c0_4 = arith.constant 0 : index
    %3 = vector.load %arg4[%c0_3, %c0_4] : memref<1x128xf32, #tpu.memory_space<vmem>>, vector<1x128xf32>
    %4 = vector.broadcast %3 : vector<1x128xf32> to vector<8x128xf32>
    %5 = arith.addf %2, %4 : vector<8x128xf32>
    %c0_5 = arith.constant 0 : index
    %c0_6 = arith.constant 0 : index
    %6 = vector.load %arg5[%c0_5, %c0_6] : memref<32x128xf32, #tpu.memory_space<vmem>>, vector<32x128xf32>
    %c0_7 = arith.constant 0 : index
    %c0_8 = arith.constant 0 : index
    %7 = vector.load %arg1[%c0_7, %c0_8] : memref<1x32xf32, #tpu.memory_space<vmem>>, vector<1x32xf32>
    %c0_9 = arith.constant 0 : index
    %c0_10 = arith.constant 0 : index
    %8 = vector.load %arg2[%c0_9, %c0_10] : memref<1x32xf32, #tpu.memory_space<vmem>>, vector<1x32xf32>
    %9 = tpu.iota {dimensions = array<i32: 0>} : vector<8x32xi32>
    %10 = tpu.iota {dimensions = array<i32: 1>} : vector<8x32xi32>
    %cst_11 = arith.constant 0.000000e+00 : f32
    %11 = vector.broadcast %cst_11 : f32 to vector<8x32xf32>
    %12 = vector.extract_strided_slice %5 {offsets = [0, 0], sizes = [1, 128], strides = [1, 1]} : vector<8x128xf32> to vector<1x128xf32>
    %cst_12 = arith.constant dense<0.000000e+00> : vector<1x128xf32>
    %13 = tpu.matmul %7, %6, %cst_12 {dimension_numbers = #tpu.dot_dimension_numbers<[1], [0], [0], [1], [0, 0, 1, 1], [], []>} : vector<1x32xf32>, vector<32x128xf32>, vector<1x128xf32> -> vector<1x128xf32>
    %14 = arith.addf %12, %13 : vector<1x128xf32>
    %15 = vector.extract_strided_slice %14 {offsets = [0, 0], sizes = [1, 32], strides = [1, 1]} : vector<1x128xf32> to vector<1x32xf32>
    %16 = arith.negf %15 : vector<1x32xf32>
    %17 = math.exp %16 : vector<1x32xf32>
    %cst_13 = arith.constant 1.000000e+00 : f32
    %18 = vector.broadcast %cst_13 : f32 to vector<1x32xf32>
    %19 = arith.addf %18, %17 : vector<1x32xf32>
    %20 = arith.divf %18, %19 : vector<1x32xf32>
    %21 = vector.extract_strided_slice %14 {offsets = [0, 32], sizes = [1, 32], strides = [1, 1]} : vector<1x128xf32> to vector<1x32xf32>
    %22 = arith.negf %21 : vector<1x32xf32>
    %23 = math.exp %22 : vector<1x32xf32>
    %cst_14 = arith.constant 1.000000e+00 : f32
    %24 = vector.broadcast %cst_14 : f32 to vector<1x32xf32>
    %25 = arith.addf %24, %23 : vector<1x32xf32>
    %26 = arith.divf %24, %25 : vector<1x32xf32>
    %27 = vector.extract_strided_slice %14 {offsets = [0, 64], sizes = [1, 32], strides = [1, 1]} : vector<1x128xf32> to vector<1x32xf32>
    %28 = math.tanh %27 : vector<1x32xf32>
    %29 = vector.extract_strided_slice %14 {offsets = [0, 96], sizes = [1, 32], strides = [1, 1]} : vector<1x128xf32> to vector<1x32xf32>
    %30 = arith.negf %29 : vector<1x32xf32>
    %31 = math.exp %30 : vector<1x32xf32>
    %cst_15 = arith.constant 1.000000e+00 : f32
    %32 = vector.broadcast %cst_15 : f32 to vector<1x32xf32>
    %33 = arith.addf %32, %31 : vector<1x32xf32>
    %34 = arith.divf %32, %33 : vector<1x32xf32>
    %35 = arith.mulf %26, %8 : vector<1x32xf32>
    %36 = arith.mulf %20, %28 : vector<1x32xf32>
    %37 = arith.addf %35, %36 : vector<1x32xf32>
    %38 = math.tanh %37 : vector<1x32xf32>
    %39 = arith.mulf %34, %38 : vector<1x32xf32>
    %40 = vector.shape_cast %39 : vector<1x32xf32> to vector<1x32xf32>
    %41 = vector.broadcast %40 : vector<1x32xf32> to vector<8x32xf32>
    %c0_i32 = arith.constant 0 : i32
    %42 = vector.broadcast %c0_i32 : i32 to vector<8x32xi32>
    %43 = arith.cmpi eq, %9, %42 : vector<8x32xi32>
    %c16_i32 = arith.constant 16 : i32
    %44 = vector.broadcast %c16_i32 : i32 to vector<8x32xi32>
    %45 = arith.cmpi slt, %10, %44 : vector<8x32xi32>
    %46 = arith.andi %43, %45 : vector<8x32xi1>
    %47 = arith.select %46, %41, %11 : vector<8x32xi1>, vector<8x32xf32>
    %c7_i32 = arith.constant 7 : i32
    %48 = vector.broadcast %c7_i32 : i32 to vector<8x32xi32>
    %49 = arith.cmpi eq, %9, %48 : vector<8x32xi32>
    %c16_i32_16 = arith.constant 16 : i32
    %50 = vector.broadcast %c16_i32_16 : i32 to vector<8x32xi32>
    %51 = arith.cmpi sge, %10, %50 : vector<8x32xi32>
    %52 = arith.andi %49, %51 : vector<8x32xi1>
    %53 = arith.select %52, %41, %47 : vector<8x32xi1>, vector<8x32xf32>
    %54 = vector.extract_strided_slice %5 {offsets = [1, 0], sizes = [1, 128], strides = [1, 1]} : vector<8x128xf32> to vector<1x128xf32>
    %cst_17 = arith.constant dense<0.000000e+00> : vector<1x128xf32>
    %55 = tpu.matmul %39, %6, %cst_17 {dimension_numbers = #tpu.dot_dimension_numbers<[1], [0], [0], [1], [0, 0, 1, 1], [], []>} : vector<1x32xf32>, vector<32x128xf32>, vector<1x128xf32> -> vector<1x128xf32>
    %56 = arith.addf %54, %55 : vector<1x128xf32>
    %57 = vector.extract_strided_slice %56 {offsets = [0, 0], sizes = [1, 32], strides = [1, 1]} : vector<1x128xf32> to vector<1x32xf32>
    %58 = arith.negf %57 : vector<1x32xf32>
    %59 = math.exp %58 : vector<1x32xf32>
    %cst_18 = arith.constant 1.000000e+00 : f32
    %60 = vector.broadcast %cst_18 : f32 to vector<1x32xf32>
    %61 = arith.addf %60, %59 : vector<1x32xf32>
    %62 = arith.divf %60, %61 : vector<1x32xf32>
    %63 = vector.extract_strided_slice %56 {offsets = [0, 32], sizes = [1, 32], strides = [1, 1]} : vector<1x128xf32> to vector<1x32xf32>
    %64 = arith.negf %63 : vector<1x32xf32>
    %65 = math.exp %64 : vector<1x32xf32>
    %cst_19 = arith.constant 1.000000e+00 : f32
    %66 = vector.broadcast %cst_19 : f32 to vector<1x32xf32>
    %67 = arith.addf %66, %65 : vector<1x32xf32>
    %68 = arith.divf %66, %67 : vector<1x32xf32>
    %69 = vector.extract_strided_slice %56 {offsets = [0, 64], sizes = [1, 32], strides = [1, 1]} : vector<1x128xf32> to vector<1x32xf32>
    %70 = math.tanh %69 : vector<1x32xf32>
    %71 = vector.extract_strided_slice %56 {offsets = [0, 96], sizes = [1, 32], strides = [1, 1]} : vector<1x128xf32> to vector<1x32xf32>
    %72 = arith.negf %71 : vector<1x32xf32>
    %73 = math.exp %72 : vector<1x32xf32>
    %cst_20 = arith.constant 1.000000e+00 : f32
    %74 = vector.broadcast %cst_20 : f32 to vector<1x32xf32>
    %75 = arith.addf %74, %73 : vector<1x32xf32>
    %76 = arith.divf %74, %75 : vector<1x32xf32>
    %77 = arith.mulf %68, %37 : vector<1x32xf32>
    %78 = arith.mulf %62, %70 : vector<1x32xf32>
    %79 = arith.addf %77, %78 : vector<1x32xf32>
    %80 = math.tanh %79 : vector<1x32xf32>
    %81 = arith.mulf %76, %80 : vector<1x32xf32>
    %82 = vector.shape_cast %81 : vector<1x32xf32> to vector<1x32xf32>
    %83 = vector.broadcast %82 : vector<1x32xf32> to vector<8x32xf32>
    %c1_i32 = arith.constant 1 : i32
    %84 = vector.broadcast %c1_i32 : i32 to vector<8x32xi32>
    %85 = arith.cmpi eq, %9, %84 : vector<8x32xi32>
    %c16_i32_21 = arith.constant 16 : i32
    %86 = vector.broadcast %c16_i32_21 : i32 to vector<8x32xi32>
    %87 = arith.cmpi slt, %10, %86 : vector<8x32xi32>
    %88 = arith.andi %85, %87 : vector<8x32xi1>
    %89 = arith.select %88, %83, %53 : vector<8x32xi1>, vector<8x32xf32>
    %c6_i32 = arith.constant 6 : i32
    %90 = vector.broadcast %c6_i32 : i32 to vector<8x32xi32>
    %91 = arith.cmpi eq, %9, %90 : vector<8x32xi32>
    %c16_i32_22 = arith.constant 16 : i32
    %92 = vector.broadcast %c16_i32_22 : i32 to vector<8x32xi32>
    %93 = arith.cmpi sge, %10, %92 : vector<8x32xi32>
    %94 = arith.andi %91, %93 : vector<8x32xi1>
    %95 = arith.select %94, %83, %89 : vector<8x32xi1>, vector<8x32xf32>
    %96 = vector.extract_strided_slice %5 {offsets = [2, 0], sizes = [1, 128], strides = [1, 1]} : vector<8x128xf32> to vector<1x128xf32>
    %cst_23 = arith.constant dense<0.000000e+00> : vector<1x128xf32>
    %97 = tpu.matmul %81, %6, %cst_23 {dimension_numbers = #tpu.dot_dimension_numbers<[1], [0], [0], [1], [0, 0, 1, 1], [], []>} : vector<1x32xf32>, vector<32x128xf32>, vector<1x128xf32> -> vector<1x128xf32>
    %98 = arith.addf %96, %97 : vector<1x128xf32>
    %99 = vector.extract_strided_slice %98 {offsets = [0, 0], sizes = [1, 32], strides = [1, 1]} : vector<1x128xf32> to vector<1x32xf32>
    %100 = arith.negf %99 : vector<1x32xf32>
    %101 = math.exp %100 : vector<1x32xf32>
    %cst_24 = arith.constant 1.000000e+00 : f32
    %102 = vector.broadcast %cst_24 : f32 to vector<1x32xf32>
    %103 = arith.addf %102, %101 : vector<1x32xf32>
    %104 = arith.divf %102, %103 : vector<1x32xf32>
    %105 = vector.extract_strided_slice %98 {offsets = [0, 32], sizes = [1, 32], strides = [1, 1]} : vector<1x128xf32> to vector<1x32xf32>
    %106 = arith.negf %105 : vector<1x32xf32>
    %107 = math.exp %106 : vector<1x32xf32>
    %cst_25 = arith.constant 1.000000e+00 : f32
    %108 = vector.broadcast %cst_25 : f32 to vector<1x32xf32>
    %109 = arith.addf %108, %107 : vector<1x32xf32>
    %110 = arith.divf %108, %109 : vector<1x32xf32>
    %111 = vector.extract_strided_slice %98 {offsets = [0, 64], sizes = [1, 32], strides = [1, 1]} : vector<1x128xf32> to vector<1x32xf32>
    %112 = math.tanh %111 : vector<1x32xf32>
    %113 = vector.extract_strided_slice %98 {offsets = [0, 96], sizes = [1, 32], strides = [1, 1]} : vector<1x128xf32> to vector<1x32xf32>
    %114 = arith.negf %113 : vector<1x32xf32>
    %115 = math.exp %114 : vector<1x32xf32>
    %cst_26 = arith.constant 1.000000e+00 : f32
    %116 = vector.broadcast %cst_26 : f32 to vector<1x32xf32>
    %117 = arith.addf %116, %115 : vector<1x32xf32>
    %118 = arith.divf %116, %117 : vector<1x32xf32>
    %119 = arith.mulf %110, %79 : vector<1x32xf32>
    %120 = arith.mulf %104, %112 : vector<1x32xf32>
    %121 = arith.addf %119, %120 : vector<1x32xf32>
    %122 = math.tanh %121 : vector<1x32xf32>
    %123 = arith.mulf %118, %122 : vector<1x32xf32>
    %124 = vector.shape_cast %123 : vector<1x32xf32> to vector<1x32xf32>
    %125 = vector.broadcast %124 : vector<1x32xf32> to vector<8x32xf32>
    %c2_i32 = arith.constant 2 : i32
    %126 = vector.broadcast %c2_i32 : i32 to vector<8x32xi32>
    %127 = arith.cmpi eq, %9, %126 : vector<8x32xi32>
    %c16_i32_27 = arith.constant 16 : i32
    %128 = vector.broadcast %c16_i32_27 : i32 to vector<8x32xi32>
    %129 = arith.cmpi slt, %10, %128 : vector<8x32xi32>
    %130 = arith.andi %127, %129 : vector<8x32xi1>
    %131 = arith.select %130, %125, %95 : vector<8x32xi1>, vector<8x32xf32>
    %c5_i32 = arith.constant 5 : i32
    %132 = vector.broadcast %c5_i32 : i32 to vector<8x32xi32>
    %133 = arith.cmpi eq, %9, %132 : vector<8x32xi32>
    %c16_i32_28 = arith.constant 16 : i32
    %134 = vector.broadcast %c16_i32_28 : i32 to vector<8x32xi32>
    %135 = arith.cmpi sge, %10, %134 : vector<8x32xi32>
    %136 = arith.andi %133, %135 : vector<8x32xi1>
    %137 = arith.select %136, %125, %131 : vector<8x32xi1>, vector<8x32xf32>
    %138 = vector.extract_strided_slice %5 {offsets = [3, 0], sizes = [1, 128], strides = [1, 1]} : vector<8x128xf32> to vector<1x128xf32>
    %cst_29 = arith.constant dense<0.000000e+00> : vector<1x128xf32>
    %139 = tpu.matmul %123, %6, %cst_29 {dimension_numbers = #tpu.dot_dimension_numbers<[1], [0], [0], [1], [0, 0, 1, 1], [], []>} : vector<1x32xf32>, vector<32x128xf32>, vector<1x128xf32> -> vector<1x128xf32>
    %140 = arith.addf %138, %139 : vector<1x128xf32>
    %141 = vector.extract_strided_slice %140 {offsets = [0, 0], sizes = [1, 32], strides = [1, 1]} : vector<1x128xf32> to vector<1x32xf32>
    %142 = arith.negf %141 : vector<1x32xf32>
    %143 = math.exp %142 : vector<1x32xf32>
    %cst_30 = arith.constant 1.000000e+00 : f32
    %144 = vector.broadcast %cst_30 : f32 to vector<1x32xf32>
    %145 = arith.addf %144, %143 : vector<1x32xf32>
    %146 = arith.divf %144, %145 : vector<1x32xf32>
    %147 = vector.extract_strided_slice %140 {offsets = [0, 32], sizes = [1, 32], strides = [1, 1]} : vector<1x128xf32> to vector<1x32xf32>
    %148 = arith.negf %147 : vector<1x32xf32>
    %149 = math.exp %148 : vector<1x32xf32>
    %cst_31 = arith.constant 1.000000e+00 : f32
    %150 = vector.broadcast %cst_31 : f32 to vector<1x32xf32>
    %151 = arith.addf %150, %149 : vector<1x32xf32>
    %152 = arith.divf %150, %151 : vector<1x32xf32>
    %153 = vector.extract_strided_slice %140 {offsets = [0, 64], sizes = [1, 32], strides = [1, 1]} : vector<1x128xf32> to vector<1x32xf32>
    %154 = math.tanh %153 : vector<1x32xf32>
    %155 = vector.extract_strided_slice %140 {offsets = [0, 96], sizes = [1, 32], strides = [1, 1]} : vector<1x128xf32> to vector<1x32xf32>
    %156 = arith.negf %155 : vector<1x32xf32>
    %157 = math.exp %156 : vector<1x32xf32>
    %cst_32 = arith.constant 1.000000e+00 : f32
    %158 = vector.broadcast %cst_32 : f32 to vector<1x32xf32>
    %159 = arith.addf %158, %157 : vector<1x32xf32>
    %160 = arith.divf %158, %159 : vector<1x32xf32>
    %161 = arith.mulf %152, %121 : vector<1x32xf32>
    %162 = arith.mulf %146, %154 : vector<1x32xf32>
    %163 = arith.addf %161, %162 : vector<1x32xf32>
    %164 = math.tanh %163 : vector<1x32xf32>
    %165 = arith.mulf %160, %164 : vector<1x32xf32>
    %166 = vector.shape_cast %165 : vector<1x32xf32> to vector<1x32xf32>
    %167 = vector.broadcast %166 : vector<1x32xf32> to vector<8x32xf32>
    %c3_i32 = arith.constant 3 : i32
    %168 = vector.broadcast %c3_i32 : i32 to vector<8x32xi32>
    %169 = arith.cmpi eq, %9, %168 : vector<8x32xi32>
    %c16_i32_33 = arith.constant 16 : i32
    %170 = vector.broadcast %c16_i32_33 : i32 to vector<8x32xi32>
    %171 = arith.cmpi slt, %10, %170 : vector<8x32xi32>
    %172 = arith.andi %169, %171 : vector<8x32xi1>
    %173 = arith.select %172, %167, %137 : vector<8x32xi1>, vector<8x32xf32>
    %c4_i32 = arith.constant 4 : i32
    %174 = vector.broadcast %c4_i32 : i32 to vector<8x32xi32>
    %175 = arith.cmpi eq, %9, %174 : vector<8x32xi32>
    %c16_i32_34 = arith.constant 16 : i32
    %176 = vector.broadcast %c16_i32_34 : i32 to vector<8x32xi32>
    %177 = arith.cmpi sge, %10, %176 : vector<8x32xi32>
    %178 = arith.andi %175, %177 : vector<8x32xi1>
    %179 = arith.select %178, %167, %173 : vector<8x32xi1>, vector<8x32xf32>
    %180 = vector.extract_strided_slice %5 {offsets = [4, 0], sizes = [1, 128], strides = [1, 1]} : vector<8x128xf32> to vector<1x128xf32>
    %cst_35 = arith.constant dense<0.000000e+00> : vector<1x128xf32>
    %181 = tpu.matmul %165, %6, %cst_35 {dimension_numbers = #tpu.dot_dimension_numbers<[1], [0], [0], [1], [0, 0, 1, 1], [], []>} : vector<1x32xf32>, vector<32x128xf32>, vector<1x128xf32> -> vector<1x128xf32>
    %182 = arith.addf %180, %181 : vector<1x128xf32>
    %183 = vector.extract_strided_slice %182 {offsets = [0, 0], sizes = [1, 32], strides = [1, 1]} : vector<1x128xf32> to vector<1x32xf32>
    %184 = arith.negf %183 : vector<1x32xf32>
    %185 = math.exp %184 : vector<1x32xf32>
    %cst_36 = arith.constant 1.000000e+00 : f32
    %186 = vector.broadcast %cst_36 : f32 to vector<1x32xf32>
    %187 = arith.addf %186, %185 : vector<1x32xf32>
    %188 = arith.divf %186, %187 : vector<1x32xf32>
    %189 = vector.extract_strided_slice %182 {offsets = [0, 32], sizes = [1, 32], strides = [1, 1]} : vector<1x128xf32> to vector<1x32xf32>
    %190 = arith.negf %189 : vector<1x32xf32>
    %191 = math.exp %190 : vector<1x32xf32>
    %cst_37 = arith.constant 1.000000e+00 : f32
    %192 = vector.broadcast %cst_37 : f32 to vector<1x32xf32>
    %193 = arith.addf %192, %191 : vector<1x32xf32>
    %194 = arith.divf %192, %193 : vector<1x32xf32>
    %195 = vector.extract_strided_slice %182 {offsets = [0, 64], sizes = [1, 32], strides = [1, 1]} : vector<1x128xf32> to vector<1x32xf32>
    %196 = math.tanh %195 : vector<1x32xf32>
    %197 = vector.extract_strided_slice %182 {offsets = [0, 96], sizes = [1, 32], strides = [1, 1]} : vector<1x128xf32> to vector<1x32xf32>
    %198 = arith.negf %197 : vector<1x32xf32>
    %199 = math.exp %198 : vector<1x32xf32>
    %cst_38 = arith.constant 1.000000e+00 : f32
    %200 = vector.broadcast %cst_38 : f32 to vector<1x32xf32>
    %201 = arith.addf %200, %199 : vector<1x32xf32>
    %202 = arith.divf %200, %201 : vector<1x32xf32>
    %203 = arith.mulf %194, %163 : vector<1x32xf32>
    %204 = arith.mulf %188, %196 : vector<1x32xf32>
    %205 = arith.addf %203, %204 : vector<1x32xf32>
    %206 = math.tanh %205 : vector<1x32xf32>
    %207 = arith.mulf %202, %206 : vector<1x32xf32>
    %208 = vector.shape_cast %207 : vector<1x32xf32> to vector<1x32xf32>
    %209 = vector.broadcast %208 : vector<1x32xf32> to vector<8x32xf32>
    %c4_i32_39 = arith.constant 4 : i32
    %210 = vector.broadcast %c4_i32_39 : i32 to vector<8x32xi32>
    %211 = arith.cmpi eq, %9, %210 : vector<8x32xi32>
    %c16_i32_40 = arith.constant 16 : i32
    %212 = vector.broadcast %c16_i32_40 : i32 to vector<8x32xi32>
    %213 = arith.cmpi slt, %10, %212 : vector<8x32xi32>
    %214 = arith.andi %211, %213 : vector<8x32xi1>
    %215 = arith.select %214, %209, %179 : vector<8x32xi1>, vector<8x32xf32>
    %c3_i32_41 = arith.constant 3 : i32
    %216 = vector.broadcast %c3_i32_41 : i32 to vector<8x32xi32>
    %217 = arith.cmpi eq, %9, %216 : vector<8x32xi32>
    %c16_i32_42 = arith.constant 16 : i32
    %218 = vector.broadcast %c16_i32_42 : i32 to vector<8x32xi32>
    %219 = arith.cmpi sge, %10, %218 : vector<8x32xi32>
    %220 = arith.andi %217, %219 : vector<8x32xi1>
    %221 = arith.select %220, %209, %215 : vector<8x32xi1>, vector<8x32xf32>
    %222 = vector.extract_strided_slice %5 {offsets = [5, 0], sizes = [1, 128], strides = [1, 1]} : vector<8x128xf32> to vector<1x128xf32>
    %cst_43 = arith.constant dense<0.000000e+00> : vector<1x128xf32>
    %223 = tpu.matmul %207, %6, %cst_43 {dimension_numbers = #tpu.dot_dimension_numbers<[1], [0], [0], [1], [0, 0, 1, 1], [], []>} : vector<1x32xf32>, vector<32x128xf32>, vector<1x128xf32> -> vector<1x128xf32>
    %224 = arith.addf %222, %223 : vector<1x128xf32>
    %225 = vector.extract_strided_slice %224 {offsets = [0, 0], sizes = [1, 32], strides = [1, 1]} : vector<1x128xf32> to vector<1x32xf32>
    %226 = arith.negf %225 : vector<1x32xf32>
    %227 = math.exp %226 : vector<1x32xf32>
    %cst_44 = arith.constant 1.000000e+00 : f32
    %228 = vector.broadcast %cst_44 : f32 to vector<1x32xf32>
    %229 = arith.addf %228, %227 : vector<1x32xf32>
    %230 = arith.divf %228, %229 : vector<1x32xf32>
    %231 = vector.extract_strided_slice %224 {offsets = [0, 32], sizes = [1, 32], strides = [1, 1]} : vector<1x128xf32> to vector<1x32xf32>
    %232 = arith.negf %231 : vector<1x32xf32>
    %233 = math.exp %232 : vector<1x32xf32>
    %cst_45 = arith.constant 1.000000e+00 : f32
    %234 = vector.broadcast %cst_45 : f32 to vector<1x32xf32>
    %235 = arith.addf %234, %233 : vector<1x32xf32>
    %236 = arith.divf %234, %235 : vector<1x32xf32>
    %237 = vector.extract_strided_slice %224 {offsets = [0, 64], sizes = [1, 32], strides = [1, 1]} : vector<1x128xf32> to vector<1x32xf32>
    %238 = math.tanh %237 : vector<1x32xf32>
    %239 = vector.extract_strided_slice %224 {offsets = [0, 96], sizes = [1, 32], strides = [1, 1]} : vector<1x128xf32> to vector<1x32xf32>
    %240 = arith.negf %239 : vector<1x32xf32>
    %241 = math.exp %240 : vector<1x32xf32>
    %cst_46 = arith.constant 1.000000e+00 : f32
    %242 = vector.broadcast %cst_46 : f32 to vector<1x32xf32>
    %243 = arith.addf %242, %241 : vector<1x32xf32>
    %244 = arith.divf %242, %243 : vector<1x32xf32>
    %245 = arith.mulf %236, %205 : vector<1x32xf32>
    %246 = arith.mulf %230, %238 : vector<1x32xf32>
    %247 = arith.addf %245, %246 : vector<1x32xf32>
    %248 = math.tanh %247 : vector<1x32xf32>
    %249 = arith.mulf %244, %248 : vector<1x32xf32>
    %250 = vector.shape_cast %249 : vector<1x32xf32> to vector<1x32xf32>
    %251 = vector.broadcast %250 : vector<1x32xf32> to vector<8x32xf32>
    %c5_i32_47 = arith.constant 5 : i32
    %252 = vector.broadcast %c5_i32_47 : i32 to vector<8x32xi32>
    %253 = arith.cmpi eq, %9, %252 : vector<8x32xi32>
    %c16_i32_48 = arith.constant 16 : i32
    %254 = vector.broadcast %c16_i32_48 : i32 to vector<8x32xi32>
    %255 = arith.cmpi slt, %10, %254 : vector<8x32xi32>
    %256 = arith.andi %253, %255 : vector<8x32xi1>
    %257 = arith.select %256, %251, %221 : vector<8x32xi1>, vector<8x32xf32>
    %c2_i32_49 = arith.constant 2 : i32
    %258 = vector.broadcast %c2_i32_49 : i32 to vector<8x32xi32>
    %259 = arith.cmpi eq, %9, %258 : vector<8x32xi32>
    %c16_i32_50 = arith.constant 16 : i32
    %260 = vector.broadcast %c16_i32_50 : i32 to vector<8x32xi32>
    %261 = arith.cmpi sge, %10, %260 : vector<8x32xi32>
    %262 = arith.andi %259, %261 : vector<8x32xi1>
    %263 = arith.select %262, %251, %257 : vector<8x32xi1>, vector<8x32xf32>
    %264 = vector.extract_strided_slice %5 {offsets = [6, 0], sizes = [1, 128], strides = [1, 1]} : vector<8x128xf32> to vector<1x128xf32>
    %cst_51 = arith.constant dense<0.000000e+00> : vector<1x128xf32>
    %265 = tpu.matmul %249, %6, %cst_51 {dimension_numbers = #tpu.dot_dimension_numbers<[1], [0], [0], [1], [0, 0, 1, 1], [], []>} : vector<1x32xf32>, vector<32x128xf32>, vector<1x128xf32> -> vector<1x128xf32>
    %266 = arith.addf %264, %265 : vector<1x128xf32>
    %267 = vector.extract_strided_slice %266 {offsets = [0, 0], sizes = [1, 32], strides = [1, 1]} : vector<1x128xf32> to vector<1x32xf32>
    %268 = arith.negf %267 : vector<1x32xf32>
    %269 = math.exp %268 : vector<1x32xf32>
    %cst_52 = arith.constant 1.000000e+00 : f32
    %270 = vector.broadcast %cst_52 : f32 to vector<1x32xf32>
    %271 = arith.addf %270, %269 : vector<1x32xf32>
    %272 = arith.divf %270, %271 : vector<1x32xf32>
    %273 = vector.extract_strided_slice %266 {offsets = [0, 32], sizes = [1, 32], strides = [1, 1]} : vector<1x128xf32> to vector<1x32xf32>
    %274 = arith.negf %273 : vector<1x32xf32>
    %275 = math.exp %274 : vector<1x32xf32>
    %cst_53 = arith.constant 1.000000e+00 : f32
    %276 = vector.broadcast %cst_53 : f32 to vector<1x32xf32>
    %277 = arith.addf %276, %275 : vector<1x32xf32>
    %278 = arith.divf %276, %277 : vector<1x32xf32>
    %279 = vector.extract_strided_slice %266 {offsets = [0, 64], sizes = [1, 32], strides = [1, 1]} : vector<1x128xf32> to vector<1x32xf32>
    %280 = math.tanh %279 : vector<1x32xf32>
    %281 = vector.extract_strided_slice %266 {offsets = [0, 96], sizes = [1, 32], strides = [1, 1]} : vector<1x128xf32> to vector<1x32xf32>
    %282 = arith.negf %281 : vector<1x32xf32>
    %283 = math.exp %282 : vector<1x32xf32>
    %cst_54 = arith.constant 1.000000e+00 : f32
    %284 = vector.broadcast %cst_54 : f32 to vector<1x32xf32>
    %285 = arith.addf %284, %283 : vector<1x32xf32>
    %286 = arith.divf %284, %285 : vector<1x32xf32>
    %287 = arith.mulf %278, %247 : vector<1x32xf32>
    %288 = arith.mulf %272, %280 : vector<1x32xf32>
    %289 = arith.addf %287, %288 : vector<1x32xf32>
    %290 = math.tanh %289 : vector<1x32xf32>
    %291 = arith.mulf %286, %290 : vector<1x32xf32>
    %292 = vector.shape_cast %291 : vector<1x32xf32> to vector<1x32xf32>
    %293 = vector.broadcast %292 : vector<1x32xf32> to vector<8x32xf32>
    %c6_i32_55 = arith.constant 6 : i32
    %294 = vector.broadcast %c6_i32_55 : i32 to vector<8x32xi32>
    %295 = arith.cmpi eq, %9, %294 : vector<8x32xi32>
    %c16_i32_56 = arith.constant 16 : i32
    %296 = vector.broadcast %c16_i32_56 : i32 to vector<8x32xi32>
    %297 = arith.cmpi slt, %10, %296 : vector<8x32xi32>
    %298 = arith.andi %295, %297 : vector<8x32xi1>
    %299 = arith.select %298, %293, %263 : vector<8x32xi1>, vector<8x32xf32>
    %c1_i32_57 = arith.constant 1 : i32
    %300 = vector.broadcast %c1_i32_57 : i32 to vector<8x32xi32>
    %301 = arith.cmpi eq, %9, %300 : vector<8x32xi32>
    %c16_i32_58 = arith.constant 16 : i32
    %302 = vector.broadcast %c16_i32_58 : i32 to vector<8x32xi32>
    %303 = arith.cmpi sge, %10, %302 : vector<8x32xi32>
    %304 = arith.andi %301, %303 : vector<8x32xi1>
    %305 = arith.select %304, %293, %299 : vector<8x32xi1>, vector<8x32xf32>
    %306 = vector.extract_strided_slice %5 {offsets = [7, 0], sizes = [1, 128], strides = [1, 1]} : vector<8x128xf32> to vector<1x128xf32>
    %cst_59 = arith.constant dense<0.000000e+00> : vector<1x128xf32>
    %307 = tpu.matmul %291, %6, %cst_59 {dimension_numbers = #tpu.dot_dimension_numbers<[1], [0], [0], [1], [0, 0, 1, 1], [], []>} : vector<1x32xf32>, vector<32x128xf32>, vector<1x128xf32> -> vector<1x128xf32>
    %308 = arith.addf %306, %307 : vector<1x128xf32>
    %309 = vector.extract_strided_slice %308 {offsets = [0, 0], sizes = [1, 32], strides = [1, 1]} : vector<1x128xf32> to vector<1x32xf32>
    %310 = arith.negf %309 : vector<1x32xf32>
    %311 = math.exp %310 : vector<1x32xf32>
    %cst_60 = arith.constant 1.000000e+00 : f32
    %312 = vector.broadcast %cst_60 : f32 to vector<1x32xf32>
    %313 = arith.addf %312, %311 : vector<1x32xf32>
    %314 = arith.divf %312, %313 : vector<1x32xf32>
    %315 = vector.extract_strided_slice %308 {offsets = [0, 32], sizes = [1, 32], strides = [1, 1]} : vector<1x128xf32> to vector<1x32xf32>
    %316 = arith.negf %315 : vector<1x32xf32>
    %317 = math.exp %316 : vector<1x32xf32>
    %cst_61 = arith.constant 1.000000e+00 : f32
    %318 = vector.broadcast %cst_61 : f32 to vector<1x32xf32>
    %319 = arith.addf %318, %317 : vector<1x32xf32>
    %320 = arith.divf %318, %319 : vector<1x32xf32>
    %321 = vector.extract_strided_slice %308 {offsets = [0, 64], sizes = [1, 32], strides = [1, 1]} : vector<1x128xf32> to vector<1x32xf32>
    %322 = math.tanh %321 : vector<1x32xf32>
    %323 = vector.extract_strided_slice %308 {offsets = [0, 96], sizes = [1, 32], strides = [1, 1]} : vector<1x128xf32> to vector<1x32xf32>
    %324 = arith.negf %323 : vector<1x32xf32>
    %325 = math.exp %324 : vector<1x32xf32>
    %cst_62 = arith.constant 1.000000e+00 : f32
    %326 = vector.broadcast %cst_62 : f32 to vector<1x32xf32>
    %327 = arith.addf %326, %325 : vector<1x32xf32>
    %328 = arith.divf %326, %327 : vector<1x32xf32>
    %329 = arith.mulf %320, %289 : vector<1x32xf32>
    %330 = arith.mulf %314, %322 : vector<1x32xf32>
    %331 = arith.addf %329, %330 : vector<1x32xf32>
    %332 = math.tanh %331 : vector<1x32xf32>
    %333 = arith.mulf %328, %332 : vector<1x32xf32>
    %334 = vector.shape_cast %333 : vector<1x32xf32> to vector<1x32xf32>
    %335 = vector.broadcast %334 : vector<1x32xf32> to vector<8x32xf32>
    %c7_i32_63 = arith.constant 7 : i32
    %336 = vector.broadcast %c7_i32_63 : i32 to vector<8x32xi32>
    %337 = arith.cmpi eq, %9, %336 : vector<8x32xi32>
    %c16_i32_64 = arith.constant 16 : i32
    %338 = vector.broadcast %c16_i32_64 : i32 to vector<8x32xi32>
    %339 = arith.cmpi slt, %10, %338 : vector<8x32xi32>
    %340 = arith.andi %337, %339 : vector<8x32xi1>
    %341 = arith.select %340, %335, %305 : vector<8x32xi1>, vector<8x32xf32>
    %c0_i32_65 = arith.constant 0 : i32
    %342 = vector.broadcast %c0_i32_65 : i32 to vector<8x32xi32>
    %343 = arith.cmpi eq, %9, %342 : vector<8x32xi32>
    %c16_i32_66 = arith.constant 16 : i32
    %344 = vector.broadcast %c16_i32_66 : i32 to vector<8x32xi32>
    %345 = arith.cmpi sge, %10, %344 : vector<8x32xi32>
    %346 = arith.andi %343, %345 : vector<8x32xi1>
    %347 = arith.select %346, %335, %341 : vector<8x32xi1>, vector<8x32xf32>
    %c0_67 = arith.constant 0 : index
    %c0_68 = arith.constant 0 : index
    %348 = vector.load %arg6[%c0_67, %c0_68] : memref<32x128xf32, #tpu.memory_space<vmem>>, vector<32x128xf32>
    %cst_69 = arith.constant dense<0.000000e+00> : vector<8x128xf32>
    %349 = tpu.matmul %347, %348, %cst_69 {dimension_numbers = #tpu.dot_dimension_numbers<[1], [0], [0], [1], [0, 0, 1, 1], [], []>} : vector<8x32xf32>, vector<32x128xf32>, vector<8x128xf32> -> vector<8x128xf32>
    %c0_70 = arith.constant 0 : index
    %c0_71 = arith.constant 0 : index
    %350 = vector.load %arg7[%c0_70, %c0_71] : memref<1x128xf32, #tpu.memory_space<vmem>>, vector<1x128xf32>
    %351 = vector.broadcast %350 : vector<1x128xf32> to vector<8x128xf32>
    %352 = arith.addf %349, %351 : vector<8x128xf32>
    %c0_72 = arith.constant 0 : index
    %c0_73 = arith.constant 0 : index
    %353 = vector.load %arg10[%c0_72, %c0_73] : memref<8x128xf32, #tpu.memory_space<vmem>>, vector<8x128xf32>
    tpu.vector_store %arg10[%c0_72, %c0_73], %352 {strides = array<i32>} : memref<8x128xf32, #tpu.memory_space<vmem>>, vector<8x128xf32>,
    %c0_74 = arith.constant 0 : index
    %c0_75 = arith.constant 0 : index
    %354 = vector.load %arg8[%c0_74, %c0_75] : memref<8x128xf32, #tpu.memory_space<vmem>>, vector<8x128xf32>
    %355 = tpu.iota {dimensions = array<i32: 1>} : vector<1x128xi32>
    %356 = tpu.iota {dimensions = array<i32: 0>} : vector<8x128xi32>
    %357 = tpu.iota {dimensions = array<i32: 1>} : vector<8x128xi32>
    %358 = arith.cmpi eq, %356, %357 : vector<8x128xi32>
    %c3_i32_76 = arith.constant 3 : i32
    %359 = vector.broadcast %c3_i32_76 : i32 to vector<1x128xi32>
    %360 = arith.cmpi eq, %355, %359 : vector<1x128xi32>
    %c5_i32_77 = arith.constant 5 : i32
    %361 = vector.broadcast %c5_i32_77 : i32 to vector<1x128xi32>
    %362 = arith.cmpi slt, %355, %361 : vector<1x128xi32>
    %cst_78 = arith.constant -1.000000e+04 : f32
    %cst_79 = arith.constant -1.000000e+30 : f32
    %363 = vector.broadcast %cst_78 : f32 to vector<1x128xf32>
    %364 = vector.broadcast %cst_79 : f32 to vector<1x128xf32>
    %365 = arith.select %362, %363, %364 : vector<1x128xi1>, vector<1x128xf32>
    %cst_80 = arith.constant 0.000000e+00 : f32
    %366 = vector.broadcast %cst_80 : f32 to vector<1x128xf32>
    %367 = arith.select %360, %366, %365 : vector<1x128xi1>, vector<1x128xf32>
    %368 = vector.shape_cast %367 : vector<1x128xf32> to vector<1x128xf32>
    %369 = vector.broadcast %368 : vector<1x128xf32> to vector<8x128xf32>
    %cst_81 = arith.constant 0.000000e+00 : f32
    %370 = vector.broadcast %cst_81 : f32 to vector<8x128xf32>
    %371 = arith.select %358, %369, %370 : vector<8x128xi1>, vector<8x128xf32>
    %cst_82 = arith.constant dense<0.000000e+00> : vector<8xf32>
    %372 = vector.multi_reduction <add>, %371, %cst_82 [1] : vector<8x128xf32> to vector<8xf32>
    %373 = vector.shape_cast %372 : vector<8xf32> to vector<8x1xf32>
    %374 = vector.extract_strided_slice %373 {offsets = [0, 0], sizes = [1, 1], strides = [1, 1]} : vector<8x1xf32> to vector<1x1xf32>
    %375 = vector.extract_strided_slice %354 {offsets = [0, 0], sizes = [1, 128], strides = [1, 1]} : vector<8x128xf32> to vector<1x128xf32>
    %376 = vector.broadcast %374 : vector<1x1xf32> to vector<1x128xf32>
    %377 = arith.addf %376, %375 : vector<1x128xf32>
    %c0_i32_83 = arith.constant 0 : i32
    %378 = vector.broadcast %c0_i32_83 : i32 to vector<1x128xi32>
    %379 = vector.extract_strided_slice %373 {offsets = [1, 0], sizes = [1, 1], strides = [1, 1]} : vector<8x1xf32> to vector<1x1xf32>
    %380 = vector.extract_strided_slice %354 {offsets = [1, 0], sizes = [1, 128], strides = [1, 1]} : vector<8x128xf32> to vector<1x128xf32>
    %381 = vector.broadcast %379 : vector<1x1xf32> to vector<1x128xf32>
    %382 = arith.addf %381, %380 : vector<1x128xf32>
    %383 = arith.cmpf ogt, %382, %377 : vector<1x128xf32>
    %384 = arith.select %383, %382, %377 : vector<1x128xi1>, vector<1x128xf32>
    %c1_i32_84 = arith.constant 1 : i32
    %385 = vector.broadcast %c1_i32_84 : i32 to vector<1x128xi32>
    %386 = arith.select %383, %385, %378 : vector<1x128xi1>, vector<1x128xi32>
    %387 = vector.extract_strided_slice %373 {offsets = [2, 0], sizes = [1, 1], strides = [1, 1]} : vector<8x1xf32> to vector<1x1xf32>
    %388 = vector.extract_strided_slice %354 {offsets = [2, 0], sizes = [1, 128], strides = [1, 1]} : vector<8x128xf32> to vector<1x128xf32>
    %389 = vector.broadcast %387 : vector<1x1xf32> to vector<1x128xf32>
    %390 = arith.addf %389, %388 : vector<1x128xf32>
    %391 = arith.cmpf ogt, %390, %384 : vector<1x128xf32>
    %392 = arith.select %391, %390, %384 : vector<1x128xi1>, vector<1x128xf32>
    %c2_i32_85 = arith.constant 2 : i32
    %393 = vector.broadcast %c2_i32_85 : i32 to vector<1x128xi32>
    %394 = arith.select %391, %393, %386 : vector<1x128xi1>, vector<1x128xi32>
    %395 = vector.extract_strided_slice %373 {offsets = [3, 0], sizes = [1, 1], strides = [1, 1]} : vector<8x1xf32> to vector<1x1xf32>
    %396 = vector.extract_strided_slice %354 {offsets = [3, 0], sizes = [1, 128], strides = [1, 1]} : vector<8x128xf32> to vector<1x128xf32>
    %397 = vector.broadcast %395 : vector<1x1xf32> to vector<1x128xf32>
    %398 = arith.addf %397, %396 : vector<1x128xf32>
    %399 = arith.cmpf ogt, %398, %392 : vector<1x128xf32>
    %400 = arith.select %399, %398, %392 : vector<1x128xi1>, vector<1x128xf32>
    %c3_i32_86 = arith.constant 3 : i32
    %401 = vector.broadcast %c3_i32_86 : i32 to vector<1x128xi32>
    %402 = arith.select %399, %401, %394 : vector<1x128xi1>, vector<1x128xi32>
    %403 = vector.extract_strided_slice %373 {offsets = [4, 0], sizes = [1, 1], strides = [1, 1]} : vector<8x1xf32> to vector<1x1xf32>
    %404 = vector.extract_strided_slice %354 {offsets = [4, 0], sizes = [1, 128], strides = [1, 1]} : vector<8x128xf32> to vector<1x128xf32>
    %405 = vector.broadcast %403 : vector<1x1xf32> to vector<1x128xf32>
    %406 = arith.addf %405, %404 : vector<1x128xf32>
    %407 = arith.cmpf ogt, %406, %400 : vector<1x128xf32>
    %408 = arith.select %407, %406, %400 : vector<1x128xi1>, vector<1x128xf32>
    %c4_i32_87 = arith.constant 4 : i32
    %409 = vector.broadcast %c4_i32_87 : i32 to vector<1x128xi32>
    %410 = arith.select %407, %409, %402 : vector<1x128xi1>, vector<1x128xi32>
    %411 = vector.extract_strided_slice %352 {offsets = [0, 0], sizes = [1, 128], strides = [1, 1]} : vector<8x128xf32> to vector<1x128xf32>
    %412 = arith.addf %408, %411 : vector<1x128xf32>
    %413 = vector.shape_cast %412 : vector<1x128xf32> to vector<1x128xf32>
    %414 = vector.broadcast %413 : vector<1x128xf32> to vector<8x128xf32>
    %cst_88 = arith.constant 0.000000e+00 : f32
    %415 = vector.broadcast %cst_88 : f32 to vector<8x128xf32>
    %416 = arith.select %358, %414, %415 : vector<8x128xi1>, vector<8x128xf32>
    %cst_89 = arith.constant dense<0.000000e+00> : vector<8xf32>
    %417 = vector.multi_reduction <add>, %416, %cst_89 [1] : vector<8x128xf32> to vector<8xf32>
    %418 = vector.shape_cast %417 : vector<8xf32> to vector<8x1xf32>
    %419 = vector.extract_strided_slice %418 {offsets = [0, 0], sizes = [1, 1], strides = [1, 1]} : vector<8x1xf32> to vector<1x1xf32>
    %420 = vector.extract_strided_slice %354 {offsets = [0, 0], sizes = [1, 128], strides = [1, 1]} : vector<8x128xf32> to vector<1x128xf32>
    %421 = vector.broadcast %419 : vector<1x1xf32> to vector<1x128xf32>
    %422 = arith.addf %421, %420 : vector<1x128xf32>
    %c0_i32_90 = arith.constant 0 : i32
    %423 = vector.broadcast %c0_i32_90 : i32 to vector<1x128xi32>
    %424 = vector.extract_strided_slice %418 {offsets = [1, 0], sizes = [1, 1], strides = [1, 1]} : vector<8x1xf32> to vector<1x1xf32>
    %425 = vector.extract_strided_slice %354 {offsets = [1, 0], sizes = [1, 128], strides = [1, 1]} : vector<8x128xf32> to vector<1x128xf32>
    %426 = vector.broadcast %424 : vector<1x1xf32> to vector<1x128xf32>
    %427 = arith.addf %426, %425 : vector<1x128xf32>
    %428 = arith.cmpf ogt, %427, %422 : vector<1x128xf32>
    %429 = arith.select %428, %427, %422 : vector<1x128xi1>, vector<1x128xf32>
    %c1_i32_91 = arith.constant 1 : i32
    %430 = vector.broadcast %c1_i32_91 : i32 to vector<1x128xi32>
    %431 = arith.select %428, %430, %423 : vector<1x128xi1>, vector<1x128xi32>
    %432 = vector.extract_strided_slice %418 {offsets = [2, 0], sizes = [1, 1], strides = [1, 1]} : vector<8x1xf32> to vector<1x1xf32>
    %433 = vector.extract_strided_slice %354 {offsets = [2, 0], sizes = [1, 128], strides = [1, 1]} : vector<8x128xf32> to vector<1x128xf32>
    %434 = vector.broadcast %432 : vector<1x1xf32> to vector<1x128xf32>
    %435 = arith.addf %434, %433 : vector<1x128xf32>
    %436 = arith.cmpf ogt, %435, %429 : vector<1x128xf32>
    %437 = arith.select %436, %435, %429 : vector<1x128xi1>, vector<1x128xf32>
    %c2_i32_92 = arith.constant 2 : i32
    %438 = vector.broadcast %c2_i32_92 : i32 to vector<1x128xi32>
    %439 = arith.select %436, %438, %431 : vector<1x128xi1>, vector<1x128xi32>
    %440 = vector.extract_strided_slice %418 {offsets = [3, 0], sizes = [1, 1], strides = [1, 1]} : vector<8x1xf32> to vector<1x1xf32>
    %441 = vector.extract_strided_slice %354 {offsets = [3, 0], sizes = [1, 128], strides = [1, 1]} : vector<8x128xf32> to vector<1x128xf32>
    %442 = vector.broadcast %440 : vector<1x1xf32> to vector<1x128xf32>
    %443 = arith.addf %442, %441 : vector<1x128xf32>
    %444 = arith.cmpf ogt, %443, %437 : vector<1x128xf32>
    %445 = arith.select %444, %443, %437 : vector<1x128xi1>, vector<1x128xf32>
    %c3_i32_93 = arith.constant 3 : i32
    %446 = vector.broadcast %c3_i32_93 : i32 to vector<1x128xi32>
    %447 = arith.select %444, %446, %439 : vector<1x128xi1>, vector<1x128xi32>
    %448 = vector.extract_strided_slice %418 {offsets = [4, 0], sizes = [1, 1], strides = [1, 1]} : vector<8x1xf32> to vector<1x1xf32>
    %449 = vector.extract_strided_slice %354 {offsets = [4, 0], sizes = [1, 128], strides = [1, 1]} : vector<8x128xf32> to vector<1x128xf32>
    %450 = vector.broadcast %448 : vector<1x1xf32> to vector<1x128xf32>
    %451 = arith.addf %450, %449 : vector<1x128xf32>
    %452 = arith.cmpf ogt, %451, %445 : vector<1x128xf32>
    %453 = arith.select %452, %451, %445 : vector<1x128xi1>, vector<1x128xf32>
    %c4_i32_94 = arith.constant 4 : i32
    %454 = vector.broadcast %c4_i32_94 : i32 to vector<1x128xi32>
    %455 = arith.select %452, %454, %447 : vector<1x128xi1>, vector<1x128xi32>
    %456 = vector.extract_strided_slice %352 {offsets = [1, 0], sizes = [1, 128], strides = [1, 1]} : vector<8x128xf32> to vector<1x128xf32>
    %457 = arith.addf %453, %456 : vector<1x128xf32>
    %458 = vector.shape_cast %457 : vector<1x128xf32> to vector<1x128xf32>
    %459 = vector.broadcast %458 : vector<1x128xf32> to vector<8x128xf32>
    %cst_95 = arith.constant 0.000000e+00 : f32
    %460 = vector.broadcast %cst_95 : f32 to vector<8x128xf32>
    %461 = arith.select %358, %459, %460 : vector<8x128xi1>, vector<8x128xf32>
    %cst_96 = arith.constant dense<0.000000e+00> : vector<8xf32>
    %462 = vector.multi_reduction <add>, %461, %cst_96 [1] : vector<8x128xf32> to vector<8xf32>
    %463 = vector.shape_cast %462 : vector<8xf32> to vector<8x1xf32>
    %464 = vector.extract_strided_slice %463 {offsets = [0, 0], sizes = [1, 1], strides = [1, 1]} : vector<8x1xf32> to vector<1x1xf32>
    %465 = vector.extract_strided_slice %354 {offsets = [0, 0], sizes = [1, 128], strides = [1, 1]} : vector<8x128xf32> to vector<1x128xf32>
    %466 = vector.broadcast %464 : vector<1x1xf32> to vector<1x128xf32>
    %467 = arith.addf %466, %465 : vector<1x128xf32>
    %c0_i32_97 = arith.constant 0 : i32
    %468 = vector.broadcast %c0_i32_97 : i32 to vector<1x128xi32>
    %469 = vector.extract_strided_slice %463 {offsets = [1, 0], sizes = [1, 1], strides = [1, 1]} : vector<8x1xf32> to vector<1x1xf32>
    %470 = vector.extract_strided_slice %354 {offsets = [1, 0], sizes = [1, 128], strides = [1, 1]} : vector<8x128xf32> to vector<1x128xf32>
    %471 = vector.broadcast %469 : vector<1x1xf32> to vector<1x128xf32>
    %472 = arith.addf %471, %470 : vector<1x128xf32>
    %473 = arith.cmpf ogt, %472, %467 : vector<1x128xf32>
    %474 = arith.select %473, %472, %467 : vector<1x128xi1>, vector<1x128xf32>
    %c1_i32_98 = arith.constant 1 : i32
    %475 = vector.broadcast %c1_i32_98 : i32 to vector<1x128xi32>
    %476 = arith.select %473, %475, %468 : vector<1x128xi1>, vector<1x128xi32>
    %477 = vector.extract_strided_slice %463 {offsets = [2, 0], sizes = [1, 1], strides = [1, 1]} : vector<8x1xf32> to vector<1x1xf32>
    %478 = vector.extract_strided_slice %354 {offsets = [2, 0], sizes = [1, 128], strides = [1, 1]} : vector<8x128xf32> to vector<1x128xf32>
    %479 = vector.broadcast %477 : vector<1x1xf32> to vector<1x128xf32>
    %480 = arith.addf %479, %478 : vector<1x128xf32>
    %481 = arith.cmpf ogt, %480, %474 : vector<1x128xf32>
    %482 = arith.select %481, %480, %474 : vector<1x128xi1>, vector<1x128xf32>
    %c2_i32_99 = arith.constant 2 : i32
    %483 = vector.broadcast %c2_i32_99 : i32 to vector<1x128xi32>
    %484 = arith.select %481, %483, %476 : vector<1x128xi1>, vector<1x128xi32>
    %485 = vector.extract_strided_slice %463 {offsets = [3, 0], sizes = [1, 1], strides = [1, 1]} : vector<8x1xf32> to vector<1x1xf32>
    %486 = vector.extract_strided_slice %354 {offsets = [3, 0], sizes = [1, 128], strides = [1, 1]} : vector<8x128xf32> to vector<1x128xf32>
    %487 = vector.broadcast %485 : vector<1x1xf32> to vector<1x128xf32>
    %488 = arith.addf %487, %486 : vector<1x128xf32>
    %489 = arith.cmpf ogt, %488, %482 : vector<1x128xf32>
    %490 = arith.select %489, %488, %482 : vector<1x128xi1>, vector<1x128xf32>
    %c3_i32_100 = arith.constant 3 : i32
    %491 = vector.broadcast %c3_i32_100 : i32 to vector<1x128xi32>
    %492 = arith.select %489, %491, %484 : vector<1x128xi1>, vector<1x128xi32>
    %493 = vector.extract_strided_slice %463 {offsets = [4, 0], sizes = [1, 1], strides = [1, 1]} : vector<8x1xf32> to vector<1x1xf32>
    %494 = vector.extract_strided_slice %354 {offsets = [4, 0], sizes = [1, 128], strides = [1, 1]} : vector<8x128xf32> to vector<1x128xf32>
    %495 = vector.broadcast %493 : vector<1x1xf32> to vector<1x128xf32>
    %496 = arith.addf %495, %494 : vector<1x128xf32>
    %497 = arith.cmpf ogt, %496, %490 : vector<1x128xf32>
    %498 = arith.select %497, %496, %490 : vector<1x128xi1>, vector<1x128xf32>
    %c4_i32_101 = arith.constant 4 : i32
    %499 = vector.broadcast %c4_i32_101 : i32 to vector<1x128xi32>
    %500 = arith.select %497, %499, %492 : vector<1x128xi1>, vector<1x128xi32>
    %501 = vector.extract_strided_slice %352 {offsets = [2, 0], sizes = [1, 128], strides = [1, 1]} : vector<8x128xf32> to vector<1x128xf32>
    %502 = arith.addf %498, %501 : vector<1x128xf32>
    %503 = vector.shape_cast %502 : vector<1x128xf32> to vector<1x128xf32>
    %504 = vector.broadcast %503 : vector<1x128xf32> to vector<8x128xf32>
    %cst_102 = arith.constant 0.000000e+00 : f32
    %505 = vector.broadcast %cst_102 : f32 to vector<8x128xf32>
    %506 = arith.select %358, %504, %505 : vector<8x128xi1>, vector<8x128xf32>
    %cst_103 = arith.constant dense<0.000000e+00> : vector<8xf32>
    %507 = vector.multi_reduction <add>, %506, %cst_103 [1] : vector<8x128xf32> to vector<8xf32>
    %508 = vector.shape_cast %507 : vector<8xf32> to vector<8x1xf32>
    %509 = vector.extract_strided_slice %508 {offsets = [0, 0], sizes = [1, 1], strides = [1, 1]} : vector<8x1xf32> to vector<1x1xf32>
    %510 = vector.extract_strided_slice %354 {offsets = [0, 0], sizes = [1, 128], strides = [1, 1]} : vector<8x128xf32> to vector<1x128xf32>
    %511 = vector.broadcast %509 : vector<1x1xf32> to vector<1x128xf32>
    %512 = arith.addf %511, %510 : vector<1x128xf32>
    %c0_i32_104 = arith.constant 0 : i32
    %513 = vector.broadcast %c0_i32_104 : i32 to vector<1x128xi32>
    %514 = vector.extract_strided_slice %508 {offsets = [1, 0], sizes = [1, 1], strides = [1, 1]} : vector<8x1xf32> to vector<1x1xf32>
    %515 = vector.extract_strided_slice %354 {offsets = [1, 0], sizes = [1, 128], strides = [1, 1]} : vector<8x128xf32> to vector<1x128xf32>
    %516 = vector.broadcast %514 : vector<1x1xf32> to vector<1x128xf32>
    %517 = arith.addf %516, %515 : vector<1x128xf32>
    %518 = arith.cmpf ogt, %517, %512 : vector<1x128xf32>
    %519 = arith.select %518, %517, %512 : vector<1x128xi1>, vector<1x128xf32>
    %c1_i32_105 = arith.constant 1 : i32
    %520 = vector.broadcast %c1_i32_105 : i32 to vector<1x128xi32>
    %521 = arith.select %518, %520, %513 : vector<1x128xi1>, vector<1x128xi32>
    %522 = vector.extract_strided_slice %508 {offsets = [2, 0], sizes = [1, 1], strides = [1, 1]} : vector<8x1xf32> to vector<1x1xf32>
    %523 = vector.extract_strided_slice %354 {offsets = [2, 0], sizes = [1, 128], strides = [1, 1]} : vector<8x128xf32> to vector<1x128xf32>
    %524 = vector.broadcast %522 : vector<1x1xf32> to vector<1x128xf32>
    %525 = arith.addf %524, %523 : vector<1x128xf32>
    %526 = arith.cmpf ogt, %525, %519 : vector<1x128xf32>
    %527 = arith.select %526, %525, %519 : vector<1x128xi1>, vector<1x128xf32>
    %c2_i32_106 = arith.constant 2 : i32
    %528 = vector.broadcast %c2_i32_106 : i32 to vector<1x128xi32>
    %529 = arith.select %526, %528, %521 : vector<1x128xi1>, vector<1x128xi32>
    %530 = vector.extract_strided_slice %508 {offsets = [3, 0], sizes = [1, 1], strides = [1, 1]} : vector<8x1xf32> to vector<1x1xf32>
    %531 = vector.extract_strided_slice %354 {offsets = [3, 0], sizes = [1, 128], strides = [1, 1]} : vector<8x128xf32> to vector<1x128xf32>
    %532 = vector.broadcast %530 : vector<1x1xf32> to vector<1x128xf32>
    %533 = arith.addf %532, %531 : vector<1x128xf32>
    %534 = arith.cmpf ogt, %533, %527 : vector<1x128xf32>
    %535 = arith.select %534, %533, %527 : vector<1x128xi1>, vector<1x128xf32>
    %c3_i32_107 = arith.constant 3 : i32
    %536 = vector.broadcast %c3_i32_107 : i32 to vector<1x128xi32>
    %537 = arith.select %534, %536, %529 : vector<1x128xi1>, vector<1x128xi32>
    %538 = vector.extract_strided_slice %508 {offsets = [4, 0], sizes = [1, 1], strides = [1, 1]} : vector<8x1xf32> to vector<1x1xf32>
    %539 = vector.extract_strided_slice %354 {offsets = [4, 0], sizes = [1, 128], strides = [1, 1]} : vector<8x128xf32> to vector<1x128xf32>
    %540 = vector.broadcast %538 : vector<1x1xf32> to vector<1x128xf32>
    %541 = arith.addf %540, %539 : vector<1x128xf32>
    %542 = arith.cmpf ogt, %541, %535 : vector<1x128xf32>
    %543 = arith.select %542, %541, %535 : vector<1x128xi1>, vector<1x128xf32>
    %c4_i32_108 = arith.constant 4 : i32
    %544 = vector.broadcast %c4_i32_108 : i32 to vector<1x128xi32>
    %545 = arith.select %542, %544, %537 : vector<1x128xi1>, vector<1x128xi32>
    %546 = vector.extract_strided_slice %352 {offsets = [3, 0], sizes = [1, 128], strides = [1, 1]} : vector<8x128xf32> to vector<1x128xf32>
    %547 = arith.addf %543, %546 : vector<1x128xf32>
    %548 = vector.shape_cast %547 : vector<1x128xf32> to vector<1x128xf32>
    %549 = vector.broadcast %548 : vector<1x128xf32> to vector<8x128xf32>
    %cst_109 = arith.constant 0.000000e+00 : f32
    %550 = vector.broadcast %cst_109 : f32 to vector<8x128xf32>
    %551 = arith.select %358, %549, %550 : vector<8x128xi1>, vector<8x128xf32>
    %cst_110 = arith.constant dense<0.000000e+00> : vector<8xf32>
    %552 = vector.multi_reduction <add>, %551, %cst_110 [1] : vector<8x128xf32> to vector<8xf32>
    %553 = vector.shape_cast %552 : vector<8xf32> to vector<8x1xf32>
    %554 = vector.extract_strided_slice %553 {offsets = [0, 0], sizes = [1, 1], strides = [1, 1]} : vector<8x1xf32> to vector<1x1xf32>
    %555 = vector.extract_strided_slice %354 {offsets = [0, 0], sizes = [1, 128], strides = [1, 1]} : vector<8x128xf32> to vector<1x128xf32>
    %556 = vector.broadcast %554 : vector<1x1xf32> to vector<1x128xf32>
    %557 = arith.addf %556, %555 : vector<1x128xf32>
    %c0_i32_111 = arith.constant 0 : i32
    %558 = vector.broadcast %c0_i32_111 : i32 to vector<1x128xi32>
    %559 = vector.extract_strided_slice %553 {offsets = [1, 0], sizes = [1, 1], strides = [1, 1]} : vector<8x1xf32> to vector<1x1xf32>
    %560 = vector.extract_strided_slice %354 {offsets = [1, 0], sizes = [1, 128], strides = [1, 1]} : vector<8x128xf32> to vector<1x128xf32>
    %561 = vector.broadcast %559 : vector<1x1xf32> to vector<1x128xf32>
    %562 = arith.addf %561, %560 : vector<1x128xf32>
    %563 = arith.cmpf ogt, %562, %557 : vector<1x128xf32>
    %564 = arith.select %563, %562, %557 : vector<1x128xi1>, vector<1x128xf32>
    %c1_i32_112 = arith.constant 1 : i32
    %565 = vector.broadcast %c1_i32_112 : i32 to vector<1x128xi32>
    %566 = arith.select %563, %565, %558 : vector<1x128xi1>, vector<1x128xi32>
    %567 = vector.extract_strided_slice %553 {offsets = [2, 0], sizes = [1, 1], strides = [1, 1]} : vector<8x1xf32> to vector<1x1xf32>
    %568 = vector.extract_strided_slice %354 {offsets = [2, 0], sizes = [1, 128], strides = [1, 1]} : vector<8x128xf32> to vector<1x128xf32>
    %569 = vector.broadcast %567 : vector<1x1xf32> to vector<1x128xf32>
    %570 = arith.addf %569, %568 : vector<1x128xf32>
    %571 = arith.cmpf ogt, %570, %564 : vector<1x128xf32>
    %572 = arith.select %571, %570, %564 : vector<1x128xi1>, vector<1x128xf32>
    %c2_i32_113 = arith.constant 2 : i32
    %573 = vector.broadcast %c2_i32_113 : i32 to vector<1x128xi32>
    %574 = arith.select %571, %573, %566 : vector<1x128xi1>, vector<1x128xi32>
    %575 = vector.extract_strided_slice %553 {offsets = [3, 0], sizes = [1, 1], strides = [1, 1]} : vector<8x1xf32> to vector<1x1xf32>
    %576 = vector.extract_strided_slice %354 {offsets = [3, 0], sizes = [1, 128], strides = [1, 1]} : vector<8x128xf32> to vector<1x128xf32>
    %577 = vector.broadcast %575 : vector<1x1xf32> to vector<1x128xf32>
    %578 = arith.addf %577, %576 : vector<1x128xf32>
    %579 = arith.cmpf ogt, %578, %572 : vector<1x128xf32>
    %580 = arith.select %579, %578, %572 : vector<1x128xi1>, vector<1x128xf32>
    %c3_i32_114 = arith.constant 3 : i32
    %581 = vector.broadcast %c3_i32_114 : i32 to vector<1x128xi32>
    %582 = arith.select %579, %581, %574 : vector<1x128xi1>, vector<1x128xi32>
    %583 = vector.extract_strided_slice %553 {offsets = [4, 0], sizes = [1, 1], strides = [1, 1]} : vector<8x1xf32> to vector<1x1xf32>
    %584 = vector.extract_strided_slice %354 {offsets = [4, 0], sizes = [1, 128], strides = [1, 1]} : vector<8x128xf32> to vector<1x128xf32>
    %585 = vector.broadcast %583 : vector<1x1xf32> to vector<1x128xf32>
    %586 = arith.addf %585, %584 : vector<1x128xf32>
    %587 = arith.cmpf ogt, %586, %580 : vector<1x128xf32>
    %588 = arith.select %587, %586, %580 : vector<1x128xi1>, vector<1x128xf32>
    %c4_i32_115 = arith.constant 4 : i32
    %589 = vector.broadcast %c4_i32_115 : i32 to vector<1x128xi32>
    %590 = arith.select %587, %589, %582 : vector<1x128xi1>, vector<1x128xi32>
    %591 = vector.extract_strided_slice %352 {offsets = [4, 0], sizes = [1, 128], strides = [1, 1]} : vector<8x128xf32> to vector<1x128xf32>
    %592 = arith.addf %588, %591 : vector<1x128xf32>
    %593 = vector.shape_cast %592 : vector<1x128xf32> to vector<1x128xf32>
    %594 = vector.broadcast %593 : vector<1x128xf32> to vector<8x128xf32>
    %cst_116 = arith.constant 0.000000e+00 : f32
    %595 = vector.broadcast %cst_116 : f32 to vector<8x128xf32>
    %596 = arith.select %358, %594, %595 : vector<8x128xi1>, vector<8x128xf32>
    %cst_117 = arith.constant dense<0.000000e+00> : vector<8xf32>
    %597 = vector.multi_reduction <add>, %596, %cst_117 [1] : vector<8x128xf32> to vector<8xf32>
    %598 = vector.shape_cast %597 : vector<8xf32> to vector<8x1xf32>
    %599 = vector.extract_strided_slice %598 {offsets = [0, 0], sizes = [1, 1], strides = [1, 1]} : vector<8x1xf32> to vector<1x1xf32>
    %600 = vector.extract_strided_slice %354 {offsets = [0, 0], sizes = [1, 128], strides = [1, 1]} : vector<8x128xf32> to vector<1x128xf32>
    %601 = vector.broadcast %599 : vector<1x1xf32> to vector<1x128xf32>
    %602 = arith.addf %601, %600 : vector<1x128xf32>
    %c0_i32_118 = arith.constant 0 : i32
    %603 = vector.broadcast %c0_i32_118 : i32 to vector<1x128xi32>
    %604 = vector.extract_strided_slice %598 {offsets = [1, 0], sizes = [1, 1], strides = [1, 1]} : vector<8x1xf32> to vector<1x1xf32>
    %605 = vector.extract_strided_slice %354 {offsets = [1, 0], sizes = [1, 128], strides = [1, 1]} : vector<8x128xf32> to vector<1x128xf32>
    %606 = vector.broadcast %604 : vector<1x1xf32> to vector<1x128xf32>
    %607 = arith.addf %606, %605 : vector<1x128xf32>
    %608 = arith.cmpf ogt, %607, %602 : vector<1x128xf32>
    %609 = arith.select %608, %607, %602 : vector<1x128xi1>, vector<1x128xf32>
    %c1_i32_119 = arith.constant 1 : i32
    %610 = vector.broadcast %c1_i32_119 : i32 to vector<1x128xi32>
    %611 = arith.select %608, %610, %603 : vector<1x128xi1>, vector<1x128xi32>
    %612 = vector.extract_strided_slice %598 {offsets = [2, 0], sizes = [1, 1], strides = [1, 1]} : vector<8x1xf32> to vector<1x1xf32>
    %613 = vector.extract_strided_slice %354 {offsets = [2, 0], sizes = [1, 128], strides = [1, 1]} : vector<8x128xf32> to vector<1x128xf32>
    %614 = vector.broadcast %612 : vector<1x1xf32> to vector<1x128xf32>
    %615 = arith.addf %614, %613 : vector<1x128xf32>
    %616 = arith.cmpf ogt, %615, %609 : vector<1x128xf32>
    %617 = arith.select %616, %615, %609 : vector<1x128xi1>, vector<1x128xf32>
    %c2_i32_120 = arith.constant 2 : i32
    %618 = vector.broadcast %c2_i32_120 : i32 to vector<1x128xi32>
    %619 = arith.select %616, %618, %611 : vector<1x128xi1>, vector<1x128xi32>
    %620 = vector.extract_strided_slice %598 {offsets = [3, 0], sizes = [1, 1], strides = [1, 1]} : vector<8x1xf32> to vector<1x1xf32>
    %621 = vector.extract_strided_slice %354 {offsets = [3, 0], sizes = [1, 128], strides = [1, 1]} : vector<8x128xf32> to vector<1x128xf32>
    %622 = vector.broadcast %620 : vector<1x1xf32> to vector<1x128xf32>
    %623 = arith.addf %622, %621 : vector<1x128xf32>
    %624 = arith.cmpf ogt, %623, %617 : vector<1x128xf32>
    %625 = arith.select %624, %623, %617 : vector<1x128xi1>, vector<1x128xf32>
    %c3_i32_121 = arith.constant 3 : i32
    %626 = vector.broadcast %c3_i32_121 : i32 to vector<1x128xi32>
    %627 = arith.select %624, %626, %619 : vector<1x128xi1>, vector<1x128xi32>
    %628 = vector.extract_strided_slice %598 {offsets = [4, 0], sizes = [1, 1], strides = [1, 1]} : vector<8x1xf32> to vector<1x1xf32>
    %629 = vector.extract_strided_slice %354 {offsets = [4, 0], sizes = [1, 128], strides = [1, 1]} : vector<8x128xf32> to vector<1x128xf32>
    %630 = vector.broadcast %628 : vector<1x1xf32> to vector<1x128xf32>
    %631 = arith.addf %630, %629 : vector<1x128xf32>
    %632 = arith.cmpf ogt, %631, %625 : vector<1x128xf32>
    %633 = arith.select %632, %631, %625 : vector<1x128xi1>, vector<1x128xf32>
    %c4_i32_122 = arith.constant 4 : i32
    %634 = vector.broadcast %c4_i32_122 : i32 to vector<1x128xi32>
    %635 = arith.select %632, %634, %627 : vector<1x128xi1>, vector<1x128xi32>
    %636 = vector.extract_strided_slice %352 {offsets = [5, 0], sizes = [1, 128], strides = [1, 1]} : vector<8x128xf32> to vector<1x128xf32>
    %637 = arith.addf %633, %636 : vector<1x128xf32>
    %638 = vector.shape_cast %637 : vector<1x128xf32> to vector<1x128xf32>
    %639 = vector.broadcast %638 : vector<1x128xf32> to vector<8x128xf32>
    %cst_123 = arith.constant 0.000000e+00 : f32
    %640 = vector.broadcast %cst_123 : f32 to vector<8x128xf32>
    %641 = arith.select %358, %639, %640 : vector<8x128xi1>, vector<8x128xf32>
    %cst_124 = arith.constant dense<0.000000e+00> : vector<8xf32>
    %642 = vector.multi_reduction <add>, %641, %cst_124 [1] : vector<8x128xf32> to vector<8xf32>
    %643 = vector.shape_cast %642 : vector<8xf32> to vector<8x1xf32>
    %644 = vector.extract_strided_slice %643 {offsets = [0, 0], sizes = [1, 1], strides = [1, 1]} : vector<8x1xf32> to vector<1x1xf32>
    %645 = vector.extract_strided_slice %354 {offsets = [0, 0], sizes = [1, 128], strides = [1, 1]} : vector<8x128xf32> to vector<1x128xf32>
    %646 = vector.broadcast %644 : vector<1x1xf32> to vector<1x128xf32>
    %647 = arith.addf %646, %645 : vector<1x128xf32>
    %c0_i32_125 = arith.constant 0 : i32
    %648 = vector.broadcast %c0_i32_125 : i32 to vector<1x128xi32>
    %649 = vector.extract_strided_slice %643 {offsets = [1, 0], sizes = [1, 1], strides = [1, 1]} : vector<8x1xf32> to vector<1x1xf32>
    %650 = vector.extract_strided_slice %354 {offsets = [1, 0], sizes = [1, 128], strides = [1, 1]} : vector<8x128xf32> to vector<1x128xf32>
    %651 = vector.broadcast %649 : vector<1x1xf32> to vector<1x128xf32>
    %652 = arith.addf %651, %650 : vector<1x128xf32>
    %653 = arith.cmpf ogt, %652, %647 : vector<1x128xf32>
    %654 = arith.select %653, %652, %647 : vector<1x128xi1>, vector<1x128xf32>
    %c1_i32_126 = arith.constant 1 : i32
    %655 = vector.broadcast %c1_i32_126 : i32 to vector<1x128xi32>
    %656 = arith.select %653, %655, %648 : vector<1x128xi1>, vector<1x128xi32>
    %657 = vector.extract_strided_slice %643 {offsets = [2, 0], sizes = [1, 1], strides = [1, 1]} : vector<8x1xf32> to vector<1x1xf32>
    %658 = vector.extract_strided_slice %354 {offsets = [2, 0], sizes = [1, 128], strides = [1, 1]} : vector<8x128xf32> to vector<1x128xf32>
    %659 = vector.broadcast %657 : vector<1x1xf32> to vector<1x128xf32>
    %660 = arith.addf %659, %658 : vector<1x128xf32>
    %661 = arith.cmpf ogt, %660, %654 : vector<1x128xf32>
    %662 = arith.select %661, %660, %654 : vector<1x128xi1>, vector<1x128xf32>
    %c2_i32_127 = arith.constant 2 : i32
    %663 = vector.broadcast %c2_i32_127 : i32 to vector<1x128xi32>
    %664 = arith.select %661, %663, %656 : vector<1x128xi1>, vector<1x128xi32>
    %665 = vector.extract_strided_slice %643 {offsets = [3, 0], sizes = [1, 1], strides = [1, 1]} : vector<8x1xf32> to vector<1x1xf32>
    %666 = vector.extract_strided_slice %354 {offsets = [3, 0], sizes = [1, 128], strides = [1, 1]} : vector<8x128xf32> to vector<1x128xf32>
    %667 = vector.broadcast %665 : vector<1x1xf32> to vector<1x128xf32>
    %668 = arith.addf %667, %666 : vector<1x128xf32>
    %669 = arith.cmpf ogt, %668, %662 : vector<1x128xf32>
    %670 = arith.select %669, %668, %662 : vector<1x128xi1>, vector<1x128xf32>
    %c3_i32_128 = arith.constant 3 : i32
    %671 = vector.broadcast %c3_i32_128 : i32 to vector<1x128xi32>
    %672 = arith.select %669, %671, %664 : vector<1x128xi1>, vector<1x128xi32>
    %673 = vector.extract_strided_slice %643 {offsets = [4, 0], sizes = [1, 1], strides = [1, 1]} : vector<8x1xf32> to vector<1x1xf32>
    %674 = vector.extract_strided_slice %354 {offsets = [4, 0], sizes = [1, 128], strides = [1, 1]} : vector<8x128xf32> to vector<1x128xf32>
    %675 = vector.broadcast %673 : vector<1x1xf32> to vector<1x128xf32>
    %676 = arith.addf %675, %674 : vector<1x128xf32>
    %677 = arith.cmpf ogt, %676, %670 : vector<1x128xf32>
    %678 = arith.select %677, %676, %670 : vector<1x128xi1>, vector<1x128xf32>
    %c4_i32_129 = arith.constant 4 : i32
    %679 = vector.broadcast %c4_i32_129 : i32 to vector<1x128xi32>
    %680 = arith.select %677, %679, %672 : vector<1x128xi1>, vector<1x128xi32>
    %681 = vector.extract_strided_slice %352 {offsets = [6, 0], sizes = [1, 128], strides = [1, 1]} : vector<8x128xf32> to vector<1x128xf32>
    %682 = arith.addf %678, %681 : vector<1x128xf32>
    %683 = vector.shape_cast %682 : vector<1x128xf32> to vector<1x128xf32>
    %684 = vector.broadcast %683 : vector<1x128xf32> to vector<8x128xf32>
    %cst_130 = arith.constant 0.000000e+00 : f32
    %685 = vector.broadcast %cst_130 : f32 to vector<8x128xf32>
    %686 = arith.select %358, %684, %685 : vector<8x128xi1>, vector<8x128xf32>
    %cst_131 = arith.constant dense<0.000000e+00> : vector<8xf32>
    %687 = vector.multi_reduction <add>, %686, %cst_131 [1] : vector<8x128xf32> to vector<8xf32>
    %688 = vector.shape_cast %687 : vector<8xf32> to vector<8x1xf32>
    %689 = vector.extract_strided_slice %688 {offsets = [0, 0], sizes = [1, 1], strides = [1, 1]} : vector<8x1xf32> to vector<1x1xf32>
    %690 = vector.extract_strided_slice %354 {offsets = [0, 0], sizes = [1, 128], strides = [1, 1]} : vector<8x128xf32> to vector<1x128xf32>
    %691 = vector.broadcast %689 : vector<1x1xf32> to vector<1x128xf32>
    %692 = arith.addf %691, %690 : vector<1x128xf32>
    %c0_i32_132 = arith.constant 0 : i32
    %693 = vector.broadcast %c0_i32_132 : i32 to vector<1x128xi32>
    %694 = vector.extract_strided_slice %688 {offsets = [1, 0], sizes = [1, 1], strides = [1, 1]} : vector<8x1xf32> to vector<1x1xf32>
    %695 = vector.extract_strided_slice %354 {offsets = [1, 0], sizes = [1, 128], strides = [1, 1]} : vector<8x128xf32> to vector<1x128xf32>
    %696 = vector.broadcast %694 : vector<1x1xf32> to vector<1x128xf32>
    %697 = arith.addf %696, %695 : vector<1x128xf32>
    %698 = arith.cmpf ogt, %697, %692 : vector<1x128xf32>
    %699 = arith.select %698, %697, %692 : vector<1x128xi1>, vector<1x128xf32>
    %c1_i32_133 = arith.constant 1 : i32
    %700 = vector.broadcast %c1_i32_133 : i32 to vector<1x128xi32>
    %701 = arith.select %698, %700, %693 : vector<1x128xi1>, vector<1x128xi32>
    %702 = vector.extract_strided_slice %688 {offsets = [2, 0], sizes = [1, 1], strides = [1, 1]} : vector<8x1xf32> to vector<1x1xf32>
    %703 = vector.extract_strided_slice %354 {offsets = [2, 0], sizes = [1, 128], strides = [1, 1]} : vector<8x128xf32> to vector<1x128xf32>
    %704 = vector.broadcast %702 : vector<1x1xf32> to vector<1x128xf32>
    %705 = arith.addf %704, %703 : vector<1x128xf32>
    %706 = arith.cmpf ogt, %705, %699 : vector<1x128xf32>
    %707 = arith.select %706, %705, %699 : vector<1x128xi1>, vector<1x128xf32>
    %c2_i32_134 = arith.constant 2 : i32
    %708 = vector.broadcast %c2_i32_134 : i32 to vector<1x128xi32>
    %709 = arith.select %706, %708, %701 : vector<1x128xi1>, vector<1x128xi32>
    %710 = vector.extract_strided_slice %688 {offsets = [3, 0], sizes = [1, 1], strides = [1, 1]} : vector<8x1xf32> to vector<1x1xf32>
    %711 = vector.extract_strided_slice %354 {offsets = [3, 0], sizes = [1, 128], strides = [1, 1]} : vector<8x128xf32> to vector<1x128xf32>
    %712 = vector.broadcast %710 : vector<1x1xf32> to vector<1x128xf32>
    %713 = arith.addf %712, %711 : vector<1x128xf32>
    %714 = arith.cmpf ogt, %713, %707 : vector<1x128xf32>
    %715 = arith.select %714, %713, %707 : vector<1x128xi1>, vector<1x128xf32>
    %c3_i32_135 = arith.constant 3 : i32
    %716 = vector.broadcast %c3_i32_135 : i32 to vector<1x128xi32>
    %717 = arith.select %714, %716, %709 : vector<1x128xi1>, vector<1x128xi32>
    %718 = vector.extract_strided_slice %688 {offsets = [4, 0], sizes = [1, 1], strides = [1, 1]} : vector<8x1xf32> to vector<1x1xf32>
    %719 = vector.extract_strided_slice %354 {offsets = [4, 0], sizes = [1, 128], strides = [1, 1]} : vector<8x128xf32> to vector<1x128xf32>
    %720 = vector.broadcast %718 : vector<1x1xf32> to vector<1x128xf32>
    %721 = arith.addf %720, %719 : vector<1x128xf32>
    %722 = arith.cmpf ogt, %721, %715 : vector<1x128xf32>
    %723 = arith.select %722, %721, %715 : vector<1x128xi1>, vector<1x128xf32>
    %c4_i32_136 = arith.constant 4 : i32
    %724 = vector.broadcast %c4_i32_136 : i32 to vector<1x128xi32>
    %725 = arith.select %722, %724, %717 : vector<1x128xi1>, vector<1x128xi32>
    %726 = vector.extract_strided_slice %352 {offsets = [7, 0], sizes = [1, 128], strides = [1, 1]} : vector<8x128xf32> to vector<1x128xf32>
    %727 = arith.addf %723, %726 : vector<1x128xf32>
    %c0_137 = arith.constant 0 : index
    %c0_138 = arith.constant 0 : index
    %728 = vector.load %arg9[%c0_137, %c0_138] : memref<1x128xf32, #tpu.memory_space<vmem>>, vector<1x128xf32>
    %729 = arith.addf %727, %728 : vector<1x128xf32>
    %cst_139 = arith.constant dense<0xFF800000> : vector<1xf32>
    %730 = vector.multi_reduction <maximumf>, %729, %cst_139 [1] : vector<1x128xf32> to vector<1xf32>
    %731 = vector.shape_cast %730 : vector<1xf32> to vector<1x1xf32>
    %c0_140 = arith.constant 0 : index
    %c0_141 = arith.constant 0 : index
    %732 = vector.load %arg11[%c0_140, %c0_141] : memref<1x1xf32, #tpu.memory_space<vmem>>, vector<1x1xf32>
    tpu.vector_store %arg11[%c0_140, %c0_141], %731 {strides = array<i32>} : memref<1x1xf32, #tpu.memory_space<vmem>>, vector<1x1xf32>,
    %733 = tpu.reduce_index %729 {axis = 1 : i32, kind = #tpu.reduction_kind<arg_max>} : vector<1x128xf32> -> vector<1xi32>
    %734 = vector.shape_cast %733 : vector<1xi32> to vector<1x1xi32>
    %735 = vector.broadcast %734 : vector<1x1xi32> to vector<1x128xi32>
    %736 = arith.cmpi eq, %355, %735 : vector<1x128xi32>
    %737 = arith.sitofp %725 : vector<1x128xi32> to vector<1x128xf32>
    %cst_142 = arith.constant 0.000000e+00 : f32
    %738 = vector.broadcast %cst_142 : f32 to vector<1x128xf32>
    %739 = arith.select %736, %737, %738 : vector<1x128xi1>, vector<1x128xf32>
    %cst_143 = arith.constant dense<0.000000e+00> : vector<1xf32>
    %740 = vector.multi_reduction <add>, %739, %cst_143 [1] : vector<1x128xf32> to vector<1xf32>
    %741 = vector.shape_cast %740 : vector<1xf32> to vector<1x1xf32>
    %742 = arith.fptosi %741 : vector<1x1xf32> to vector<1x1xi32>
    %743 = vector.broadcast %742 : vector<1x1xi32> to vector<1x128xi32>
    %744 = arith.cmpi eq, %355, %743 : vector<1x128xi32>
    %745 = arith.sitofp %680 : vector<1x128xi32> to vector<1x128xf32>
    %cst_144 = arith.constant 0.000000e+00 : f32
    %746 = vector.broadcast %cst_144 : f32 to vector<1x128xf32>
    %747 = arith.select %744, %745, %746 : vector<1x128xi1>, vector<1x128xf32>
    %cst_145 = arith.constant dense<0.000000e+00> : vector<1xf32>
    %748 = vector.multi_reduction <add>, %747, %cst_145 [1] : vector<1x128xf32> to vector<1xf32>
    %749 = vector.shape_cast %748 : vector<1xf32> to vector<1x1xf32>
    %750 = arith.fptosi %749 : vector<1x1xf32> to vector<1x1xi32>
    %751 = vector.broadcast %750 : vector<1x1xi32> to vector<1x128xi32>
    %752 = arith.cmpi eq, %355, %751 : vector<1x128xi32>
    %753 = arith.sitofp %635 : vector<1x128xi32> to vector<1x128xf32>
    %cst_146 = arith.constant 0.000000e+00 : f32
    %754 = vector.broadcast %cst_146 : f32 to vector<1x128xf32>
    %755 = arith.select %752, %753, %754 : vector<1x128xi1>, vector<1x128xf32>
    %cst_147 = arith.constant dense<0.000000e+00> : vector<1xf32>
    %756 = vector.multi_reduction <add>, %755, %cst_147 [1] : vector<1x128xf32> to vector<1xf32>
    %757 = vector.shape_cast %756 : vector<1xf32> to vector<1x1xf32>
    %758 = arith.fptosi %757 : vector<1x1xf32> to vector<1x1xi32>
    %759 = vector.broadcast %758 : vector<1x1xi32> to vector<1x128xi32>
    %760 = arith.cmpi eq, %355, %759 : vector<1x128xi32>
    %761 = arith.sitofp %590 : vector<1x128xi32> to vector<1x128xf32>
    %cst_148 = arith.constant 0.000000e+00 : f32
    %762 = vector.broadcast %cst_148 : f32 to vector<1x128xf32>
    %763 = arith.select %760, %761, %762 : vector<1x128xi1>, vector<1x128xf32>
    %cst_149 = arith.constant dense<0.000000e+00> : vector<1xf32>
    %764 = vector.multi_reduction <add>, %763, %cst_149 [1] : vector<1x128xf32> to vector<1xf32>
    %765 = vector.shape_cast %764 : vector<1xf32> to vector<1x1xf32>
    %766 = arith.fptosi %765 : vector<1x1xf32> to vector<1x1xi32>
    %767 = vector.broadcast %766 : vector<1x1xi32> to vector<1x128xi32>
    %768 = arith.cmpi eq, %355, %767 : vector<1x128xi32>
    %769 = arith.sitofp %545 : vector<1x128xi32> to vector<1x128xf32>
    %cst_150 = arith.constant 0.000000e+00 : f32
    %770 = vector.broadcast %cst_150 : f32 to vector<1x128xf32>
    %771 = arith.select %768, %769, %770 : vector<1x128xi1>, vector<1x128xf32>
    %cst_151 = arith.constant dense<0.000000e+00> : vector<1xf32>
    %772 = vector.multi_reduction <add>, %771, %cst_151 [1] : vector<1x128xf32> to vector<1xf32>
    %773 = vector.shape_cast %772 : vector<1xf32> to vector<1x1xf32>
    %774 = arith.fptosi %773 : vector<1x1xf32> to vector<1x1xi32>
    %775 = vector.broadcast %774 : vector<1x1xi32> to vector<1x128xi32>
    %776 = arith.cmpi eq, %355, %775 : vector<1x128xi32>
    %777 = arith.sitofp %500 : vector<1x128xi32> to vector<1x128xf32>
    %cst_152 = arith.constant 0.000000e+00 : f32
    %778 = vector.broadcast %cst_152 : f32 to vector<1x128xf32>
    %779 = arith.select %776, %777, %778 : vector<1x128xi1>, vector<1x128xf32>
    %cst_153 = arith.constant dense<0.000000e+00> : vector<1xf32>
    %780 = vector.multi_reduction <add>, %779, %cst_153 [1] : vector<1x128xf32> to vector<1xf32>
    %781 = vector.shape_cast %780 : vector<1xf32> to vector<1x1xf32>
    %782 = arith.fptosi %781 : vector<1x1xf32> to vector<1x1xi32>
    %783 = vector.broadcast %782 : vector<1x1xi32> to vector<1x128xi32>
    %784 = arith.cmpi eq, %355, %783 : vector<1x128xi32>
    %785 = arith.sitofp %455 : vector<1x128xi32> to vector<1x128xf32>
    %cst_154 = arith.constant 0.000000e+00 : f32
    %786 = vector.broadcast %cst_154 : f32 to vector<1x128xf32>
    %787 = arith.select %784, %785, %786 : vector<1x128xi1>, vector<1x128xf32>
    %cst_155 = arith.constant dense<0.000000e+00> : vector<1xf32>
    %788 = vector.multi_reduction <add>, %787, %cst_155 [1] : vector<1x128xf32> to vector<1xf32>
    %789 = vector.shape_cast %788 : vector<1xf32> to vector<1x1xf32>
    %790 = arith.fptosi %789 : vector<1x1xf32> to vector<1x1xi32>
    %791 = vector.broadcast %790 : vector<1x1xi32> to vector<1x128xi32>
    %792 = arith.cmpi eq, %355, %791 : vector<1x128xi32>
    %793 = arith.sitofp %410 : vector<1x128xi32> to vector<1x128xf32>
    %cst_156 = arith.constant 0.000000e+00 : f32
    %794 = vector.broadcast %cst_156 : f32 to vector<1x128xf32>
    %795 = arith.select %792, %793, %794 : vector<1x128xi1>, vector<1x128xf32>
    %cst_157 = arith.constant dense<0.000000e+00> : vector<1xf32>
    %796 = vector.multi_reduction <add>, %795, %cst_157 [1] : vector<1x128xf32> to vector<1xf32>
    %797 = vector.shape_cast %796 : vector<1xf32> to vector<1x1xf32>
    %798 = arith.fptosi %797 : vector<1x1xf32> to vector<1x1xi32>
    %c0_i32_158 = arith.constant 0 : i32
    %799 = vector.broadcast %c0_i32_158 : i32 to vector<1x128xi32>
    %c0_i32_159 = arith.constant 0 : i32
    %800 = vector.broadcast %c0_i32_159 : i32 to vector<1x128xi32>
    %801 = arith.cmpi eq, %355, %800 : vector<1x128xi32>
    %802 = vector.shape_cast %790 : vector<1x1xi32> to vector<1x1xi32>
    %803 = vector.broadcast %802 : vector<1x1xi32> to vector<1x128xi32>
    %804 = arith.select %801, %803, %799 : vector<1x128xi1>, vector<1x128xi32>
    %c1_i32_160 = arith.constant 1 : i32
    %805 = vector.broadcast %c1_i32_160 : i32 to vector<1x128xi32>
    %806 = arith.cmpi eq, %355, %805 : vector<1x128xi32>
    %807 = vector.shape_cast %782 : vector<1x1xi32> to vector<1x1xi32>
    %808 = vector.broadcast %807 : vector<1x1xi32> to vector<1x128xi32>
    %809 = arith.select %806, %808, %804 : vector<1x128xi1>, vector<1x128xi32>
    %c2_i32_161 = arith.constant 2 : i32
    %810 = vector.broadcast %c2_i32_161 : i32 to vector<1x128xi32>
    %811 = arith.cmpi eq, %355, %810 : vector<1x128xi32>
    %812 = vector.shape_cast %774 : vector<1x1xi32> to vector<1x1xi32>
    %813 = vector.broadcast %812 : vector<1x1xi32> to vector<1x128xi32>
    %814 = arith.select %811, %813, %809 : vector<1x128xi1>, vector<1x128xi32>
    %c3_i32_162 = arith.constant 3 : i32
    %815 = vector.broadcast %c3_i32_162 : i32 to vector<1x128xi32>
    %816 = arith.cmpi eq, %355, %815 : vector<1x128xi32>
    %817 = vector.shape_cast %766 : vector<1x1xi32> to vector<1x1xi32>
    %818 = vector.broadcast %817 : vector<1x1xi32> to vector<1x128xi32>
    %819 = arith.select %816, %818, %814 : vector<1x128xi1>, vector<1x128xi32>
    %c4_i32_163 = arith.constant 4 : i32
    %820 = vector.broadcast %c4_i32_163 : i32 to vector<1x128xi32>
    %821 = arith.cmpi eq, %355, %820 : vector<1x128xi32>
    %822 = vector.shape_cast %758 : vector<1x1xi32> to vector<1x1xi32>
    %823 = vector.broadcast %822 : vector<1x1xi32> to vector<1x128xi32>
    %824 = arith.select %821, %823, %819 : vector<1x128xi1>, vector<1x128xi32>
    %c5_i32_164 = arith.constant 5 : i32
    %825 = vector.broadcast %c5_i32_164 : i32 to vector<1x128xi32>
    %826 = arith.cmpi eq, %355, %825 : vector<1x128xi32>
    %827 = vector.shape_cast %750 : vector<1x1xi32> to vector<1x1xi32>
    %828 = vector.broadcast %827 : vector<1x1xi32> to vector<1x128xi32>
    %829 = arith.select %826, %828, %824 : vector<1x128xi1>, vector<1x128xi32>
    %c6_i32_165 = arith.constant 6 : i32
    %830 = vector.broadcast %c6_i32_165 : i32 to vector<1x128xi32>
    %831 = arith.cmpi eq, %355, %830 : vector<1x128xi32>
    %832 = vector.shape_cast %742 : vector<1x1xi32> to vector<1x1xi32>
    %833 = vector.broadcast %832 : vector<1x1xi32> to vector<1x128xi32>
    %834 = arith.select %831, %833, %829 : vector<1x128xi1>, vector<1x128xi32>
    %c7_i32_166 = arith.constant 7 : i32
    %835 = vector.broadcast %c7_i32_166 : i32 to vector<1x128xi32>
    %836 = arith.cmpi eq, %355, %835 : vector<1x128xi32>
    %837 = vector.shape_cast %734 : vector<1x1xi32> to vector<1x1xi32>
    %838 = vector.broadcast %837 : vector<1x1xi32> to vector<1x128xi32>
    %839 = arith.select %836, %838, %834 : vector<1x128xi1>, vector<1x128xi32>
    %c8_i32 = arith.constant 8 : i32
    %840 = vector.broadcast %c8_i32 : i32 to vector<1x128xi32>
    %841 = arith.cmpi eq, %355, %840 : vector<1x128xi32>
    %842 = vector.shape_cast %798 : vector<1x1xi32> to vector<1x1xi32>
    %843 = vector.broadcast %842 : vector<1x1xi32> to vector<1x128xi32>
    %844 = arith.select %841, %843, %839 : vector<1x128xi1>, vector<1x128xi32>
    %c0_167 = arith.constant 0 : index
    %c0_168 = arith.constant 0 : index
    %845 = vector.load %arg12[%c0_167, %c0_168] : memref<1x128xi32, #tpu.memory_space<vmem>>, vector<1x128xi32>
    tpu.vector_store %arg12[%c0_167, %c0_168], %844 {strides = array<i32>} : memref<1x128xi32, #tpu.memory_space<vmem>>, vector<1x128xi32>,
    return
  }
}

</mosaic_0001>

<llo_original>
// kernel: forward.1
$region0: #{forward.1}
  #allocation0 [shape = 'u32[]', space=smem, size = 0x4, offset = 0x4, fixed_abs, tag = 'smem constant byte address 0x4 - core index']
  #allocation1 [shape = 'u32[72,128]{1,0:T(1,128)}', space=vmem, size = 0x9000, scoped, tag = 'internal scratch']
  %s0 = inlined_call_operand.vmem [shape: f32[8,32], index: 0, kind: input, shape index: {}]
  %s1 = inlined_call_operand.vmem [shape: f32[1,32], index: 1, kind: input, shape index: {}]
  %s2 = inlined_call_operand.vmem [shape: f32[1,32], index: 2, kind: input, shape index: {}]
  %s3 = inlined_call_operand.vmem [shape: f32[32,128], index: 3, kind: input, shape index: {}]
  %s4 = inlined_call_operand.vmem [shape: f32[1,128], index: 4, kind: input, shape index: {}]
  %s5 = inlined_call_operand.vmem [shape: f32[32,128], index: 5, kind: input, shape index: {}]
  %s6 = inlined_call_operand.vmem [shape: f32[32,128], index: 6, kind: input, shape index: {}]
  %s7 = inlined_call_operand.vmem [shape: f32[1,128], index: 7, kind: input, shape index: {}]
  %s8 = inlined_call_operand.vmem [shape: f32[8,128], index: 8, kind: input, shape index: {}]
  %s9 = inlined_call_operand.vmem [shape: f32[1,128], index: 9, kind: input, shape index: {}]
  %s10 = inlined_call_operand.hbm [shape: f32[8,128], index: 10, kind: output, shape index: {0}]
  %s11 = inlined_call_operand.hbm [shape: f32[1,1], index: 11, kind: output, shape index: {1}]
  %s12 = inlined_call_operand.hbm [shape: s32[1,128], index: 12, kind: output, shape index: {2}]
  %13 = xla_tuple %s10, %s11, %s12
  %s14 = sld [smem:[#allocation0]]
  $region66: #{forward.1} parent=0
    _
  %s16 = ssub.s32 1, %s14
  %s17 = scalar_select 0, %s16, %s14
  $region1: #{forward.1} parent=0
    #allocation2 [shape = 'u8[4096]{0}', space=vmem, size = 0x1000, scoped, tag = 'output window, operand 0, single buffered']
    #allocation3 [shape = 's32[1]{0}', space=sflag, size = 0x4, scoped, tag = 'scoped memory for forward.1']
    #allocation4 [shape = 'u8[512]{0}', space=vmem, size = 0x400, scoped, tag = 'output window, operand 1, single buffered']
    #allocation5 [shape = 's32[1]{0}', space=sflag, size = 0x4, scoped, tag = 'scoped memory for forward.1']
    #allocation6 [shape = 'u8[512]{0}', space=vmem, size = 0x400, scoped, tag = 'output window, operand 2, single buffered']
    %18 = vsyncpa [#allocation3], 0
    %19 = vsyncpa [#allocation5], 0
    // Predicated region
    $region2: #{forward.1} parent=1 // pred_check
      _
    $region3: #{forward.1} parent=1 // pred_check_branch
      %21 = sbr.rel (0) target = $region5
    $region4: #{forward.1} parent=1 // pred_region
      _
    $region5: #{forward.1} parent=1 // pred_fallthru
      _
    // Predicated region
    $region6: #{forward.1} parent=1 // pred_check
      _
    $region7: #{forward.1} parent=1 // pred_check_branch
      %23 = sbr.rel (0) target = $region9
    $region8: #{forward.1} parent=1 // pred_region
      _
    $region9: #{forward.1} parent=1 // pred_fallthru
      _
    // Predicated region
    $region10: #{forward.1} parent=1 // pred_check
      _
    $region11: #{forward.1} parent=1 // pred_check_branch
      %25 = sbr.rel (0) target = $region13
    $region12: #{forward.1} parent=1 // pred_region
      _
    $region13: #{forward.1} parent=1 // pred_fallthru
      _
    // Predicated region
    $region14: #{forward.1} parent=1 // pred_check
      _
    $region15: #{forward.1} parent=1 // pred_check_branch
      %27 = sbr.rel (0) target = $region17
    $region16: #{forward.1} parent=1 // pred_region
      _
    $region17: #{forward.1} parent=1 // pred_fallthru
      _
    // Predicated region
    $region18: #{forward.1} parent=1 // pred_check
      _
    $region19: #{forward.1} parent=1 // pred_check_branch
      %29 = sbr.rel (0) target = $region21
    $region20: #{forward.1} parent=1 // pred_region
      _
    $region21: #{forward.1} parent=1 // pred_fallthru
      _
    // Predicated region
    $region22: #{forward.1} parent=1 // pred_check
      _
    $region23: #{forward.1} parent=1 // pred_check_branch
      %31 = sbr.rel (0) target = $region25
    $region24: #{forward.1} parent=1 // pred_region
      _
    $region25: #{forward.1} parent=1 // pred_fallthru
      _
    // Predicated region
    $region26: #{forward.1} parent=1 // pred_check
      _
    $region27: #{forward.1} parent=1 // pred_check_branch
      %33 = sbr.rel (0) target = $region29
    $region28: #{forward.1} parent=1 // pred_region
      _
    $region29: #{forward.1} parent=1 // pred_fallthru
      _
    // Predicated region
    $region30: #{forward.1} parent=1 // pred_check
      _
    $region31: #{forward.1} parent=1 // pred_check_branch
      %35 = sbr.rel (0) target = $region33
    $region32: #{forward.1} parent=1 // pred_region
      _
    $region33: #{forward.1} parent=1 // pred_fallthru
      _
    // Predicated region
    $region34: #{forward.1} parent=1 // pred_check
      _
    $region35: #{forward.1} parent=1 // pred_check_branch
      %37 = sbr.rel (0) target = $region37
    $region36: #{forward.1} parent=1 // pred_region
      _
    $region37: #{forward.1} parent=1 // pred_fallthru
      _
    // Predicated region
    $region38: #{forward.1} parent=1 // pred_check
      _
    $region39: #{forward.1} parent=1 // pred_check_branch
      %39 = sbr.rel (0) target = $region41
    $region40: #{forward.1} parent=1 // pred_region
      _
    $region41: #{forward.1} parent=1 // pred_fallthru
      _
    %v40 = vld [vmem:[%s0] sm:$0xff]
    %v41 = vld [vmem:[%s3] sm:$0xff]
    %v42 = vld [vmem:[%s3 + $0x8] sm:$0xff]
    %v43 = vld [vmem:[%s3 + $0x10] sm:$0xff]
    %v44 = vld [vmem:[%s3 + $0x18] sm:$0xff]
    %v45 = vld [vmem:[%s4] sm:$0x1]
    %v47 = vperm.slane %v45, 0
    %vm49 = vcmask 261120
    %v51 = vsel %vm49, %v40, 0
    %53 = vmatpush.msra.mxu0 0.0
    %54 = vmatpush.msra.mxu0 0.0
    %55 = vmatpush.msra.mxu0 0.0
    %56 = vmatpush.msra.mxu0 0.0
    %57 = vmatpush.msra.mxu0 0.0
    %58 = vmatpush.msra.mxu0 0.0
    %59 = vmatpush.msra.mxu0 0.0
    %60 = vmatpush.msra.mxu0 0.0
    %61 = vmatpush.msra.mxu0 0.0
    %62 = vmatpush.msra.mxu0 0.0
    %63 = vmatpush.msra.mxu0 0.0
    %64 = vmatpush.msra.mxu0 0.0
    %65 = vmatpush.msra.mxu0 %v44
    %66 = vmatpush.msra.mxu0 %v43
    %67 = vmatpush.msra.mxu0 %v42
    %68 = vmatpush.msra.mxu0 %v41
    %69 = vmatmul.f32.gmra.mxu0 %v51
    %v70 = vpop.f32.mrf.mxu0
    %v71 = vadd.f32 %v47, %v70
    %72 = vdwg.mxu0
    %v73 = vld [vmem:[%s5] sm:$0xff]
    %v74 = vld [vmem:[%s5 + $0x8] sm:$0xff]
    %v75 = vld [vmem:[%s5 + $0x10] sm:$0xff]
    %v76 = vld [vmem:[%s5 + $0x18] sm:$0xff]
    %v77 = vld [vmem:[%s1] sm:$0x1]
    %v78 = vld [vmem:[%s2] sm:$0x1]
    %v79 = vlaneseq
    %v80 = vshrl.u32 %v79, 7
    %v81 = vlaneseq
    %v82 = vand.u32 %v81, 127
    %v84 = vsel %vm49, %v77, 0
    %86 = vmatpush.msra.mxu0 0.0
    %87 = vmatpush.msra.mxu0 0.0
    %88 = vmatpush.msra.mxu0 0.0
    %89 = vmatpush.msra.mxu0 0.0
    %90 = vmatpush.msra.mxu0 0.0
    %91 = vmatpush.msra.mxu0 0.0
    %92 = vmatpush.msra.mxu0 0.0
    %93 = vmatpush.msra.mxu0 0.0
    %94 = vmatpush.msra.mxu0 0.0
    %95 = vmatpush.msra.mxu0 0.0
    %96 = vmatpush.msra.mxu0 0.0
    %97 = vmatpush.msra.mxu0 0.0
    %98 = vmatpush.msra.mxu0 %v76
    %99 = vmatpush.msra.mxu0 %v75
    %100 = vmatpush.msra.mxu0 %v74
    %101 = vmatpush.msra.mxu0 %v73
    %102 = vmatmul.f32.gmra.mxu0 %v84
    %v103 = vpop.f32.mrf.mxu0
    %v104 = vadd.f32 0.0, %v103
    %105 = vdwg.mxu0
    %v106 = vadd.f32 %v71, %v104
    %v107 = vxor.u32 %v106, 2147483648
    %v108 = vmul.f32 %v107, 1.442695
    %v109 = vpow.pop %v108
    %v110 = vadd.f32 %v109, 1.0
    %v111 = vrcp.pop %v110
    %v112 = vmul.f32 %v110, %v111
    %v113 = vsub.f32 1.0, %v112
    %v114 = vmul.f32 %v111, %v113
    %v115 = vadd.f32 %v111, %v114
    %vm116 = vweird.f32 %v110
    %vm117 = vweird.f32 %v111
    %vm118 = vmor %vm116, %vm117
    %v119 = vsel %vm118, %v111, %v115
    %v120 = vand.u32 2147483647, %v110
    %vm121 = vcmp.eq.f32.partialorder %v120, 8.507059e+37
    %v122 = vand.u32 %v110, 2147483648
    %v123 = vor.u32 1.1754944e-38, %v122
    %v124 = vsel %vm121, %v123, %v119
    %v125 = vmul.f32 1.0, %v124
    %v126 = vtanh.pop %v106
    %v128 = vperm.slane %v78, 0
    %129 = vrot.lane.b32.xlu0 %v128, 32
    %v130 = vpop.permute.xlu0 %129
    %v132 = vmul.f32 %v125, %v130
    %134 = vrot.lane.b32.xlu0 %v126, 64
    %v135 = vpop.permute.xlu0 %134
    %v137 = vmul.f32 %v125, %v135
    %139 = vrot.lane.b32.xlu0 %v137, 32
    %v140 = vpop.permute.xlu0 %139
    %v142 = vadd.f32 %v132, %v140
    %v143 = vtanh.pop %v142
    %145 = vrot.lane.b32.xlu0 %v143, 64
    %v146 = vpop.permute.xlu0 %145
    %v148 = vmul.f32 %v125, %v146
    %v149 = vperm.slane %v148, 0
    %vm150 = vcmp.eq.s32.totalorder %v80, 0
    %vm151 = vcmp.lt.s32.totalorder %v82, 16
    %vm152 = vmand %vm150, %vm151
    %154 = vrot.lane.b32.xlu0 %v149, 32
    %v155 = vpop.permute.xlu0 %154
    %v157 = vsel %vm152, %v155, 0.0
    %vm158 = vcmp.eq.s32.totalorder %v80, 7
    %vm159 = vcmp.ge.s32.totalorder %v82, 16
    %vm160 = vmand %vm158, %vm159
    %v161 = vsel %vm160, %v155, %v157
    %163 = vrot.lane.b32.xlu0 %v148, 32
    %v164 = vpop.permute.xlu0 %163
    %v165 = vsel %vm49, %v164, 0
    %167 = vmatpush.msra.mxu0 0.0
    %168 = vmatpush.msra.mxu0 0.0
    %169 = vmatpush.msra.mxu0 0.0
    %170 = vmatpush.msra.mxu0 0.0
    %171 = vmatpush.msra.mxu0 0.0
    %172 = vmatpush.msra.mxu0 0.0
    %173 = vmatpush.msra.mxu0 0.0
    %174 = vmatpush.msra.mxu0 0.0
    %175 = vmatpush.msra.mxu0 0.0
    %176 = vmatpush.msra.mxu0 0.0
    %177 = vmatpush.msra.mxu0 0.0
    %178 = vmatpush.msra.mxu0 0.0
    %179 = vmatpush.msra.mxu0 %v76
    %180 = vmatpush.msra.mxu0 %v75
    %181 = vmatpush.msra.mxu0 %v74
    %182 = vmatpush.msra.mxu0 %v73
    %183 = vmatmul.f32.gmra.mxu0 %v165
    %v184 = vpop.f32.mrf.mxu0
    %v185 = vadd.f32 0.0, %v184
    %186 = vdwg.mxu0
    %v188 = vrot.slane %v185, 7
    %v190 = vadd.f32 %v71, %v188
    %v191 = vxor.u32 %v190, 2147483648
    %v192 = vmul.f32 %v191, 1.442695
    %v193 = vpow.pop %v192
    %v194 = vadd.f32 %v193, 1.0
    %v195 = vrcp.pop %v194
    %v196 = vmul.f32 %v194, %v195
    %v197 = vsub.f32 1.0, %v196
    %v198 = vmul.f32 %v195, %v197
    %v199 = vadd.f32 %v195, %v198
    %vm200 = vweird.f32 %v194
    %vm201 = vweird.f32 %v195
    %vm202 = vmor %vm200, %vm201
    %v203 = vsel %vm202, %v195, %v199
    %v204 = vand.u32 2147483647, %v194
    %vm205 = vcmp.eq.f32.partialorder %v204, 8.507059e+37
    %v206 = vand.u32 %v194, 2147483648
    %v207 = vor.u32 1.1754944e-38, %v206
    %v208 = vsel %vm205, %v207, %v203
    %v209 = vmul.f32 1.0, %v208
    %v210 = vtanh.pop %v190
    %v212 = vrot.slane %v142, 7
    %v214 = vmul.f32 %v209, %v212
    %216 = vrot.lane.b32.xlu0 %v210, 64
    %v217 = vpop.permute.xlu0 %216
    %v219 = vmul.f32 %v209, %v217
    %221 = vrot.lane.b32.xlu0 %v219, 32
    %v222 = vpop.permute.xlu0 %221
    %v224 = vadd.f32 %v214, %v222
    %v225 = vtanh.pop %v224
    %227 = vrot.lane.b32.xlu0 %v225, 64
    %v228 = vpop.permute.xlu0 %227
    %v230 = vmul.f32 %v209, %v228
    %v231 = vperm.slane %v230, 1
    %vm232 = vcmp.eq.s32.totalorder %v80, 1
    %vm233 = vmand %vm232, %vm151
    %235 = vrot.lane.b32.xlu0 %v231, 32
    %v236 = vpop.permute.xlu0 %235
    %v238 = vsel %vm233, %v236, %v161
    %vm239 = vcmp.eq.s32.totalorder %v80, 6
    %vm240 = vmand %vm239, %vm159
    %v241 = vsel %vm240, %v236, %v238
    %v243 = vrot.slane %v230, 1
    %244 = vrot.lane.b32.xlu0 %v243, 32
    %v245 = vpop.permute.xlu0 %244
    %v246 = vsel %vm49, %v245, 0
    %248 = vmatpush.msra.mxu0 0.0
    %249 = vmatpush.msra.mxu0 0.0
    %250 = vmatpush.msra.mxu0 0.0
    %251 = vmatpush.msra.mxu0 0.0
    %252 = vmatpush.msra.mxu0 0.0
    %253 = vmatpush.msra.mxu0 0.0
    %254 = vmatpush.msra.mxu0 0.0
    %255 = vmatpush.msra.mxu0 0.0
    %256 = vmatpush.msra.mxu0 0.0
    %257 = vmatpush.msra.mxu0 0.0
    %258 = vmatpush.msra.mxu0 0.0
    %259 = vmatpush.msra.mxu0 0.0
    %260 = vmatpush.msra.mxu0 %v76
    %261 = vmatpush.msra.mxu0 %v75
    %262 = vmatpush.msra.mxu0 %v74
    %263 = vmatpush.msra.mxu0 %v73
    %264 = vmatmul.f32.gmra.mxu0 %v246
    %v265 = vpop.f32.mrf.mxu0
    %v266 = vadd.f32 0.0, %v265
    %267 = vdwg.mxu0
    %v269 = vrot.slane %v266, 6
    %v271 = vadd.f32 %v71, %v269
    %v272 = vxor.u32 %v271, 2147483648
    %v273 = vmul.f32 %v272, 1.442695
    %v274 = vpow.pop %v273
    %v275 = vadd.f32 %v274, 1.0
    %v276 = vrcp.pop %v275
    %v277 = vmul.f32 %v275, %v276
    %v278 = vsub.f32 1.0, %v277
    %v279 = vmul.f32 %v276, %v278
    %v280 = vadd.f32 %v276, %v279
    %vm281 = vweird.f32 %v275
    %vm282 = vweird.f32 %v276
    %vm283 = vmor %vm281, %vm282
    %v284 = vsel %vm283, %v276, %v280
    %v285 = vand.u32 2147483647, %v275
    %vm286 = vcmp.eq.f32.partialorder %v285, 8.507059e+37
    %v287 = vand.u32 %v275, 2147483648
    %v288 = vor.u32 1.1754944e-38, %v287
    %v289 = vsel %vm286, %v288, %v284
    %v290 = vmul.f32 1.0, %v289
    %v291 = vtanh.pop %v271
    %v293 = vrot.slane %v224, 7
    %v295 = vmul.f32 %v290, %v293
    %297 = vrot.lane.b32.xlu0 %v291, 64
    %v298 = vpop.permute.xlu0 %297
    %v300 = vmul.f32 %v290, %v298
    %302 = vrot.lane.b32.xlu0 %v300, 32
    %v303 = vpop.permute.xlu0 %302
    %v305 = vadd.f32 %v295, %v303
    %v306 = vtanh.pop %v305
    %308 = vrot.lane.b32.xlu0 %v306, 64
    %v309 = vpop.permute.xlu0 %308
    %v311 = vmul.f32 %v290, %v309
    %v312 = vperm.slane %v311, 2
    %vm313 = vcmp.eq.s32.totalorder %v80, 2
    %vm314 = vmand %vm313, %vm151
    %316 = vrot.lane.b32.xlu0 %v312, 32
    %v317 = vpop.permute.xlu0 %316
    %v319 = vsel %vm314, %v317, %v241
    %vm320 = vcmp.eq.s32.totalorder %v80, 5
    %vm321 = vmand %vm320, %vm159
    %v322 = vsel %vm321, %v317, %v319
    %v324 = vrot.slane %v311, 2
    %325 = vrot.lane.b32.xlu0 %v324, 32
    %v326 = vpop.permute.xlu0 %325
    %v327 = vsel %vm49, %v326, 0
    %329 = vmatpush.msra.mxu0 0.0
    %330 = vmatpush.msra.mxu0 0.0
    %331 = vmatpush.msra.mxu0 0.0
    %332 = vmatpush.msra.mxu0 0.0
    %333 = vmatpush.msra.mxu0 0.0
    %334 = vmatpush.msra.mxu0 0.0
    %335 = vmatpush.msra.mxu0 0.0
    %336 = vmatpush.msra.mxu0 0.0
    %337 = vmatpush.msra.mxu0 0.0
    %338 = vmatpush.msra.mxu0 0.0
    %339 = vmatpush.msra.mxu0 0.0
    %340 = vmatpush.msra.mxu0 0.0
    %341 = vmatpush.msra.mxu0 %v76
    %342 = vmatpush.msra.mxu0 %v75
    %343 = vmatpush.msra.mxu0 %v74
    %344 = vmatpush.msra.mxu0 %v73
    %345 = vmatmul.f32.gmra.mxu0 %v327
    %v346 = vpop.f32.mrf.mxu0
    %v347 = vadd.f32 0.0, %v346
    %348 = vdwg.mxu0
    %v350 = vrot.slane %v347, 5
    %v352 = vadd.f32 %v71, %v350
    %v353 = vxor.u32 %v352, 2147483648
    %v354 = vmul.f32 %v353, 1.442695
    %v355 = vpow.pop %v354
    %v356 = vadd.f32 %v355, 1.0
    %v357 = vrcp.pop %v356
    %v358 = vmul.f32 %v356, %v357
    %v359 = vsub.f32 1.0, %v358
    %v360 = vmul.f32 %v357, %v359
    %v361 = vadd.f32 %v357, %v360
    %vm362 = vweird.f32 %v356
    %vm363 = vweird.f32 %v357
    %vm364 = vmor %vm362, %vm363
    %v365 = vsel %vm364, %v357, %v361
    %v366 = vand.u32 2147483647, %v356
    %vm367 = vcmp.eq.f32.partialorder %v366, 8.507059e+37
    %v368 = vand.u32 %v356, 2147483648
    %v369 = vor.u32 1.1754944e-38, %v368
    %v370 = vsel %vm367, %v369, %v365
    %v371 = vmul.f32 1.0, %v370
    %v372 = vtanh.pop %v352
    %v374 = vrot.slane %v305, 7
    %v376 = vmul.f32 %v371, %v374
    %378 = vrot.lane.b32.xlu0 %v372, 64
    %v379 = vpop.permute.xlu0 %378
    %v381 = vmul.f32 %v371, %v379
    %383 = vrot.lane.b32.xlu0 %v381, 32
    %v384 = vpop.permute.xlu0 %383
    %v386 = vadd.f32 %v376, %v384
    %v387 = vtanh.pop %v386
    %389 = vrot.lane.b32.xlu0 %v387, 64
    %v390 = vpop.permute.xlu0 %389
    %v392 = vmul.f32 %v371, %v390
    %v393 = vperm.slane %v392, 3
    %vm394 = vcmp.eq.s32.totalorder %v80, 3
    %vm395 = vmand %vm394, %vm151
    %397 = vrot.lane.b32.xlu0 %v393, 32
    %v398 = vpop.permute.xlu0 %397
    %v400 = vsel %vm395, %v398, %v322
    %vm401 = vcmp.eq.s32.totalorder %v80, 4
    %vm402 = vmand %vm401, %vm159
    %v403 = vsel %vm402, %v398, %v400
    %v405 = vrot.slane %v392, 3
    %406 = vrot.lane.b32.xlu0 %v405, 32
    %v407 = vpop.permute.xlu0 %406
    %v408 = vsel %vm49, %v407, 0
    %410 = vmatpush.msra.mxu0 0.0
    %411 = vmatpush.msra.mxu0 0.0
    %412 = vmatpush.msra.mxu0 0.0
    %413 = vmatpush.msra.mxu0 0.0
    %414 = vmatpush.msra.mxu0 0.0
    %415 = vmatpush.msra.mxu0 0.0
    %416 = vmatpush.msra.mxu0 0.0
    %417 = vmatpush.msra.mxu0 0.0
    %418 = vmatpush.msra.mxu0 0.0
    %419 = vmatpush.msra.mxu0 0.0
    %420 = vmatpush.msra.mxu0 0.0
    %421 = vmatpush.msra.mxu0 0.0
    %422 = vmatpush.msra.mxu0 %v76
    %423 = vmatpush.msra.mxu0 %v75
    %424 = vmatpush.msra.mxu0 %v74
    %425 = vmatpush.msra.mxu0 %v73
    %426 = vmatmul.f32.gmra.mxu0 %v408
    %v427 = vpop.f32.mrf.mxu0
    %v428 = vadd.f32 0.0, %v427
    %429 = vdwg.mxu0
    %v431 = vrot.slane %v428, 4
    %v433 = vadd.f32 %v71, %v431
    %v434 = vxor.u32 %v433, 2147483648
    %v435 = vmul.f32 %v434, 1.442695
    %v436 = vpow.pop %v435
    %v437 = vadd.f32 %v436, 1.0
    %v438 = vrcp.pop %v437
    %v439 = vmul.f32 %v437, %v438
    %v440 = vsub.f32 1.0, %v439
    %v441 = vmul.f32 %v438, %v440
    %v442 = vadd.f32 %v438, %v441
    %vm443 = vweird.f32 %v437
    %vm444 = vweird.f32 %v438
    %vm445 = vmor %vm443, %vm444
    %v446 = vsel %vm445, %v438, %v442
    %v447 = vand.u32 2147483647, %v437
    %vm448 = vcmp.eq.f32.partialorder %v447, 8.507059e+37
    %v449 = vand.u32 %v437, 2147483648
    %v450 = vor.u32 1.1754944e-38, %v449
    %v451 = vsel %vm448, %v450, %v446
    %v452 = vmul.f32 1.0, %v451
    %v453 = vtanh.pop %v433
    %v455 = vrot.slane %v386, 7
    %v457 = vmul.f32 %v452, %v455
    %459 = vrot.lane.b32.xlu0 %v453, 64
    %v460 = vpop.permute.xlu0 %459
    %v462 = vmul.f32 %v452, %v460
    %464 = vrot.lane.b32.xlu0 %v462, 32
    %v465 = vpop.permute.xlu0 %464
    %v467 = vadd.f32 %v457, %v465
    %v468 = vtanh.pop %v467
    %470 = vrot.lane.b32.xlu0 %v468, 64
    %v471 = vpop.permute.xlu0 %470
    %v473 = vmul.f32 %v452, %v471
    %v474 = vperm.slane %v473, 4
    %vm475 = vmand %vm401, %vm151
    %477 = vrot.lane.b32.xlu0 %v474, 32
    %v478 = vpop.permute.xlu0 %477
    %v480 = vsel %vm475, %v478, %v403
    %vm481 = vmand %vm394, %vm159
    %v482 = vsel %vm481, %v478, %v480
    %v484 = vrot.slane %v473, 4
    %485 = vrot.lane.b32.xlu0 %v484, 32
    %v486 = vpop.permute.xlu0 %485
    %v487 = vsel %vm49, %v486, 0
    %489 = vmatpush.msra.mxu0 0.0
    %490 = vmatpush.msra.mxu0 0.0
    %491 = vmatpush.msra.mxu0 0.0
    %492 = vmatpush.msra.mxu0 0.0
    %493 = vmatpush.msra.mxu0 0.0
    %494 = vmatpush.msra.mxu0 0.0
    %495 = vmatpush.msra.mxu0 0.0
    %496 = vmatpush.msra.mxu0 0.0
    %497 = vmatpush.msra.mxu0 0.0
    %498 = vmatpush.msra.mxu0 0.0
    %499 = vmatpush.msra.mxu0 0.0
    %500 = vmatpush.msra.mxu0 0.0
    %501 = vmatpush.msra.mxu0 %v76
    %502 = vmatpush.msra.mxu0 %v75
    %503 = vmatpush.msra.mxu0 %v74
    %504 = vmatpush.msra.mxu0 %v73
    %505 = vmatmul.f32.gmra.mxu0 %v487
    %v506 = vpop.f32.mrf.mxu0
    %v507 = vadd.f32 0.0, %v506
    %508 = vdwg.mxu0
    %v510 = vrot.slane %v507, 3
    %v512 = vadd.f32 %v71, %v510
    %v513 = vxor.u32 %v512, 2147483648
    %v514 = vmul.f32 %v513, 1.442695
    %v515 = vpow.pop %v514
    %v516 = vadd.f32 %v515, 1.0
    %v517 = vrcp.pop %v516
    %v518 = vmul.f32 %v516, %v517
    %v519 = vsub.f32 1.0, %v518
    %v520 = vmul.f32 %v517, %v519
    %v521 = vadd.f32 %v517, %v520
    %vm522 = vweird.f32 %v516
    %vm523 = vweird.f32 %v517
    %vm524 = vmor %vm522, %vm523
    %v525 = vsel %vm524, %v517, %v521
    %v526 = vand.u32 2147483647, %v516
    %vm527 = vcmp.eq.f32.partialorder %v526, 8.507059e+37
    %v528 = vand.u32 %v516, 2147483648
    %v529 = vor.u32 1.1754944e-38, %v528
    %v530 = vsel %vm527, %v529, %v525
    %v531 = vmul.f32 1.0, %v530
    %v532 = vtanh.pop %v512
    %v534 = vrot.slane %v467, 7
    %v536 = vmul.f32 %v531, %v534
    %538 = vrot.lane.b32.xlu0 %v532, 64
    %v539 = vpop.permute.xlu0 %538
    %v541 = vmul.f32 %v531, %v539
    %543 = vrot.lane.b32.xlu0 %v541, 32
    %v544 = vpop.permute.xlu0 %543
    %v546 = vadd.f32 %v536, %v544
    %v547 = vtanh.pop %v546
    %549 = vrot.lane.b32.xlu0 %v547, 64
    %v550 = vpop.permute.xlu0 %549
    %v552 = vmul.f32 %v531, %v550
    %v553 = vperm.slane %v552, 5
    %vm554 = vmand %vm320, %vm151
    %556 = vrot.lane.b32.xlu0 %v553, 32
    %v557 = vpop.permute.xlu0 %556
    %v559 = vsel %vm554, %v557, %v482
    %vm560 = vmand %vm313, %vm159
    %v561 = vsel %vm560, %v557, %v559
    %v563 = vrot.slane %v552, 5
    %564 = vrot.lane.b32.xlu0 %v563, 32
    %v565 = vpop.permute.xlu0 %564
    %v566 = vsel %vm49, %v565, 0
    %568 = vmatpush.msra.mxu0 0.0
    %569 = vmatpush.msra.mxu0 0.0
    %570 = vmatpush.msra.mxu0 0.0
    %571 = vmatpush.msra.mxu0 0.0
    %572 = vmatpush.msra.mxu0 0.0
    %573 = vmatpush.msra.mxu0 0.0
    %574 = vmatpush.msra.mxu0 0.0
    %575 = vmatpush.msra.mxu0 0.0
    %576 = vmatpush.msra.mxu0 0.0
    %577 = vmatpush.msra.mxu0 0.0
    %578 = vmatpush.msra.mxu0 0.0
    %579 = vmatpush.msra.mxu0 0.0
    %580 = vmatpush.msra.mxu0 %v76
    %581 = vmatpush.msra.mxu0 %v75
    %582 = vmatpush.msra.mxu0 %v74
    %583 = vmatpush.msra.mxu0 %v73
    %584 = vmatmul.f32.gmra.mxu0 %v566
    %v585 = vpop.f32.mrf.mxu0
    %v586 = vadd.f32 0.0, %v585
    %587 = vdwg.mxu0
    %v589 = vrot.slane %v586, 2
    %v591 = vadd.f32 %v71, %v589
    %v592 = vxor.u32 %v591, 2147483648
    %v593 = vmul.f32 %v592, 1.442695
    %v594 = vpow.pop %v593
    %v595 = vadd.f32 %v594, 1.0
    %v596 = vrcp.pop %v595
    %v597 = vmul.f32 %v595, %v596
    %v598 = vsub.f32 1.0, %v597
    %v599 = vmul.f32 %v596, %v598
    %v600 = vadd.f32 %v596, %v599
    %vm601 = vweird.f32 %v595
    %vm602 = vweird.f32 %v596
    %vm603 = vmor %vm601, %vm602
    %v604 = vsel %vm603, %v596, %v600
    %v605 = vand.u32 2147483647, %v595
    %vm606 = vcmp.eq.f32.partialorder %v605, 8.507059e+37
    %v607 = vand.u32 %v595, 2147483648
    %v608 = vor.u32 1.1754944e-38, %v607
    %v609 = vsel %vm606, %v608, %v604
    %v610 = vmul.f32 1.0, %v609
    %v611 = vtanh.pop %v591
    %v613 = vrot.slane %v546, 7
    %v615 = vmul.f32 %v610, %v613
    %617 = vrot.lane.b32.xlu0 %v611, 64
    %v618 = vpop.permute.xlu0 %617
    %v620 = vmul.f32 %v610, %v618
    %622 = vrot.lane.b32.xlu0 %v620, 32
    %v623 = vpop.permute.xlu0 %622
    %v625 = vadd.f32 %v615, %v623
    %v626 = vtanh.pop %v625
    %628 = vrot.lane.b32.xlu0 %v626, 64
    %v629 = vpop.permute.xlu0 %628
    %v631 = vmul.f32 %v610, %v629
    %v632 = vperm.slane %v631, 6
    %vm633 = vmand %vm239, %vm151
    %635 = vrot.lane.b32.xlu0 %v632, 32
    %v636 = vpop.permute.xlu0 %635
    %v638 = vsel %vm633, %v636, %v561
    %vm639 = vmand %vm232, %vm159
    %v640 = vsel %vm639, %v636, %v638
    %v642 = vrot.slane %v631, 6
    %643 = vrot.lane.b32.xlu0 %v642, 32
    %v644 = vpop.permute.xlu0 %643
    %v645 = vsel %vm49, %v644, 0
    %647 = vmatpush.msra.mxu0 0.0
    %648 = vmatpush.msra.mxu0 0.0
    %649 = vmatpush.msra.mxu0 0.0
    %650 = vmatpush.msra.mxu0 0.0
    %651 = vmatpush.msra.mxu0 0.0
    %652 = vmatpush.msra.mxu0 0.0
    %653 = vmatpush.msra.mxu0 0.0
    %654 = vmatpush.msra.mxu0 0.0
    %655 = vmatpush.msra.mxu0 0.0
    %656 = vmatpush.msra.mxu0 0.0
    %657 = vmatpush.msra.mxu0 0.0
    %658 = vmatpush.msra.mxu0 0.0
    %659 = vmatpush.msra.mxu0 %v76
    %660 = vmatpush.msra.mxu0 %v75
    %661 = vmatpush.msra.mxu0 %v74
    %662 = vmatpush.msra.mxu0 %v73
    %663 = vmatmul.f32.gmra.mxu0 %v645
    %v664 = vpop.f32.mrf.mxu0
    %v665 = vadd.f32 0.0, %v664
    %666 = vdwg.mxu0
    %v668 = vrot.slane %v665, 1
    %v670 = vadd.f32 %v71, %v668
    %v671 = vxor.u32 %v670, 2147483648
    %v672 = vmul.f32 %v671, 1.442695
    %v673 = vpow.pop %v672
    %v674 = vadd.f32 %v673, 1.0
    %v675 = vrcp.pop %v674
    %v676 = vmul.f32 %v674, %v675
    %v677 = vsub.f32 1.0, %v676
    %v678 = vmul.f32 %v675, %v677
    %v679 = vadd.f32 %v675, %v678
    %vm680 = vweird.f32 %v674
    %vm681 = vweird.f32 %v675
    %vm682 = vmor %vm680, %vm681
    %v683 = vsel %vm682, %v675, %v679
    %v684 = vand.u32 2147483647, %v674
    %vm685 = vcmp.eq.f32.partialorder %v684, 8.507059e+37
    %v686 = vand.u32 %v674, 2147483648
    %v687 = vor.u32 1.1754944e-38, %v686
    %v688 = vsel %vm685, %v687, %v683
    %v689 = vmul.f32 1.0, %v688
    %v690 = vtanh.pop %v670
    %v692 = vrot.slane %v625, 7
    %v694 = vmul.f32 %v689, %v692
    %696 = vrot.lane.b32.xlu0 %v690, 64
    %v697 = vpop.permute.xlu0 %696
    %v699 = vmul.f32 %v689, %v697
    %701 = vrot.lane.b32.xlu0 %v699, 32
    %v702 = vpop.permute.xlu0 %701
    %v704 = vadd.f32 %v694, %v702
    %v705 = vtanh.pop %v704
    %707 = vrot.lane.b32.xlu0 %v705, 64
    %v708 = vpop.permute.xlu0 %707
    %v710 = vmul.f32 %v689, %v708
    %v711 = vperm.slane %v710, 7
    %vm712 = vmand %vm158, %vm151
    %714 = vrot.lane.b32.xlu0 %v711, 32
    %v715 = vpop.permute.xlu0 %714
    %v717 = vsel %vm712, %v715, %v640
    %vm718 = vmand %vm150, %vm159
    %v719 = vsel %vm718, %v715, %v717
    %v720 = vld [vmem:[%s6] sm:$0xff]
    %v721 = vld [vmem:[%s6 + $0x8] sm:$0xff]
    %v722 = vld [vmem:[%s6 + $0x10] sm:$0xff]
    %v723 = vld [vmem:[%s6 + $0x18] sm:$0xff]
    %v724 = vld [vmem:[%s7] sm:$0x1]
    %v726 = vperm.slane %v724, 0
    %v729 = vsel %vm49, %v719, 0
    %731 = vmatpush.msra.mxu0 0.0
    %732 = vmatpush.msra.mxu0 0.0
    %733 = vmatpush.msra.mxu0 0.0
    %734 = vmatpush.msra.mxu0 0.0
    %735 = vmatpush.msra.mxu0 0.0
    %736 = vmatpush.msra.mxu0 0.0
    %737 = vmatpush.msra.mxu0 0.0
    %738 = vmatpush.msra.mxu0 0.0
    %739 = vmatpush.msra.mxu0 0.0
    %740 = vmatpush.msra.mxu0 0.0
    %741 = vmatpush.msra.mxu0 0.0
    %742 = vmatpush.msra.mxu0 0.0
    %743 = vmatpush.msra.mxu0 %v723
    %744 = vmatpush.msra.mxu0 %v722
    %745 = vmatpush.msra.mxu0 %v721
    %746 = vmatpush.msra.mxu0 %v720
    %747 = vmatmul.f32.gmra.mxu0 %v729
    %v748 = vpop.f32.mrf.mxu0
    %v749 = vadd.f32 %v726, %v748
    %750 = vdwg.mxu0
    %751 = vst [vmem:[#allocation2] sm:$0xff] %v749
    %v752 = vld [vmem:[%s8] sm:$0xff]
    %vm753 = vcmp.eq.s32.totalorder %v80, %v82
    %vm754 = vcmp.eq.s32.totalorder %v82, 3
    %vm755 = vcmp.lt.s32.totalorder %v82, 5
    %v756 = vsel %vm755, -10000.0, -1e+30
    %v757 = vsel %vm754, 0.0, %v756
    %v758 = vsel %vm753, %v757, 0.0
    %759 = vadd.xlane.f32.xlu0 %v758
    %v760 = vpop.xlane.xlu0 %759
    %v761 = vadd.f32 %v760, %v752
    %v763 = vrot.slane %v761, 7
    %vm765 = vcmp.gt.f32.partialorder %v761, %v763
    %v766 = vsel %vm765, %v761, %v763
    %v767 = vsel %vm765, 1, 0
    %v769 = vrot.slane %v766, 7
    %vm771 = vcmp.gt.f32.partialorder %v761, %v769
    %v772 = vsel %vm771, %v761, %v769
    %v773 = vrot.slane %v767, 7
    %v774 = vsel %vm771, 2, %v773
    %v776 = vrot.slane %v772, 7
    %vm778 = vcmp.gt.f32.partialorder %v761, %v776
    %v779 = vsel %vm778, %v761, %v776
    %v780 = vrot.slane %v774, 7
    %v781 = vsel %vm778, 3, %v780
    %v783 = vrot.slane %v779, 7
    %vm785 = vcmp.gt.f32.partialorder %v761, %v783
    %v786 = vsel %vm785, %v761, %v783
    %v787 = vrot.slane %v781, 7
    %v788 = vsel %vm785, 4, %v787
    %v790 = vrot.slane %v749, 4
    %v792 = vadd.f32 %v786, %v790
    %v793 = vperm.slane %v792, 4
    %v794 = vsel %vm753, %v793, 0.0
    %795 = vadd.xlane.f32.xlu0 %v794
    %v796 = vpop.xlane.xlu0 %795
    %v797 = vadd.f32 %v796, %v752
    %v799 = vrot.slane %v797, 7
    %vm801 = vcmp.gt.f32.partialorder %v797, %v799
    %v802 = vsel %vm801, %v797, %v799
    %v803 = vsel %vm801, 1, 0
    %v805 = vrot.slane %v802, 7
    %vm807 = vcmp.gt.f32.partialorder %v797, %v805
    %v808 = vsel %vm807, %v797, %v805
    %v809 = vrot.slane %v803, 7
    %v810 = vsel %vm807, 2, %v809
    %v812 = vrot.slane %v808, 7
    %vm814 = vcmp.gt.f32.partialorder %v797, %v812
    %v815 = vsel %vm814, %v797, %v812
    %v816 = vrot.slane %v810, 7
    %v817 = vsel %vm814, 3, %v816
    %v819 = vrot.slane %v815, 7
    %vm821 = vcmp.gt.f32.partialorder %v797, %v819
    %v822 = vsel %vm821, %v797, %v819
    %v823 = vrot.slane %v817, 7
    %v824 = vsel %vm821, 4, %v823
    %v825 = vrot.slane %v749, 5
    %v827 = vadd.f32 %v822, %v825
    %v828 = vperm.slane %v827, 4
    %v829 = vsel %vm753, %v828, 0.0
    %830 = vadd.xlane.f32.xlu0 %v829
    %v831 = vpop.xlane.xlu0 %830
    %v832 = vadd.f32 %v831, %v752
    %v834 = vrot.slane %v832, 7
    %vm836 = vcmp.gt.f32.partialorder %v832, %v834
    %v837 = vsel %vm836, %v832, %v834
    %v838 = vsel %vm836, 1, 0
    %v840 = vrot.slane %v837, 7
    %vm842 = vcmp.gt.f32.partialorder %v832, %v840
    %v843 = vsel %vm842, %v832, %v840
    %v844 = vrot.slane %v838, 7
    %v845 = vsel %vm842, 2, %v844
    %v847 = vrot.slane %v843, 7
    %vm849 = vcmp.gt.f32.partialorder %v832, %v847
    %v850 = vsel %vm849, %v832, %v847
    %v851 = vrot.slane %v845, 7
    %v852 = vsel %vm849, 3, %v851
    %v854 = vrot.slane %v850, 7
    %vm856 = vcmp.gt.f32.partialorder %v832, %v854
    %v857 = vsel %vm856, %v832, %v854
    %v858 = vrot.slane %v852, 7
    %v859 = vsel %vm856, 4, %v858
    %v860 = vrot.slane %v749, 6
    %v862 = vadd.f32 %v857, %v860
    %v863 = vperm.slane %v862, 4
    %v864 = vsel %vm753, %v863, 0.0
    %865 = vadd.xlane.f32.xlu0 %v864
    %v866 = vpop.xlane.xlu0 %865
    %v867 = vadd.f32 %v866, %v752
    %v869 = vrot.slane %v867, 7
    %vm871 = vcmp.gt.f32.partialorder %v867, %v869
    %v872 = vsel %vm871, %v867, %v869
    %v873 = vsel %vm871, 1, 0
    %v875 = vrot.slane %v872, 7
    %vm877 = vcmp.gt.f32.partialorder %v867, %v875
    %v878 = vsel %vm877, %v867, %v875
    %v879 = vrot.slane %v873, 7
    %v880 = vsel %vm877, 2, %v879
    %v882 = vrot.slane %v878, 7
    %vm884 = vcmp.gt.f32.partialorder %v867, %v882
    %v885 = vsel %vm884, %v867, %v882
    %v886 = vrot.slane %v880, 7
    %v887 = vsel %vm884, 3, %v886
    %v889 = vrot.slane %v885, 7
    %vm891 = vcmp.gt.f32.partialorder %v867, %v889
    %v892 = vsel %vm891, %v867, %v889
    %v893 = vrot.slane %v887, 7
    %v894 = vsel %vm891, 4, %v893
    %v895 = vrot.slane %v749, 7
    %v897 = vadd.f32 %v892, %v895
    %v898 = vperm.slane %v897, 4
    %v899 = vsel %vm753, %v898, 0.0
    %900 = vadd.xlane.f32.xlu0 %v899
    %v901 = vpop.xlane.xlu0 %900
    %v902 = vadd.f32 %v901, %v752
    %v904 = vrot.slane %v902, 7
    %vm906 = vcmp.gt.f32.partialorder %v902, %v904
    %v907 = vsel %vm906, %v902, %v904
    %v908 = vsel %vm906, 1, 0
    %v910 = vrot.slane %v907, 7
    %vm912 = vcmp.gt.f32.partialorder %v902, %v910
    %v913 = vsel %vm912, %v902, %v910
    %v914 = vrot.slane %v908, 7
    %v915 = vsel %vm912, 2, %v914
    %v917 = vrot.slane %v913, 7
    %vm919 = vcmp.gt.f32.partialorder %v902, %v917
    %v920 = vsel %vm919, %v902, %v917
    %v921 = vrot.slane %v915, 7
    %v922 = vsel %vm919, 3, %v921
    %v924 = vrot.slane %v920, 7
    %vm926 = vcmp.gt.f32.partialorder %v902, %v924
    %v927 = vsel %vm926, %v902, %v924
    %v928 = vrot.slane %v922, 7
    %v929 = vsel %vm926, 4, %v928
    %v930 = vadd.f32 %v927, %v749
    %v931 = vperm.slane %v930, 4
    %v932 = vsel %vm753, %v931, 0.0
    %933 = vadd.xlane.f32.xlu0 %v932
    %v934 = vpop.xlane.xlu0 %933
    %v935 = vadd.f32 %v934, %v752
    %v937 = vrot.slane %v935, 7
    %vm939 = vcmp.gt.f32.partialorder %v935, %v937
    %v940 = vsel %vm939, %v935, %v937
    %v941 = vsel %vm939, 1, 0
    %v943 = vrot.slane %v940, 7
    %vm945 = vcmp.gt.f32.partialorder %v935, %v943
    %v946 = vsel %vm945, %v935, %v943
    %v947 = vrot.slane %v941, 7
    %v948 = vsel %vm945, 2, %v947
    %v950 = vrot.slane %v946, 7
    %vm952 = vcmp.gt.f32.partialorder %v935, %v950
    %v953 = vsel %vm952, %v935, %v950
    %v954 = vrot.slane %v948, 7
    %v955 = vsel %vm952, 3, %v954
    %v957 = vrot.slane %v953, 7
    %vm959 = vcmp.gt.f32.partialorder %v935, %v957
    %v960 = vsel %vm959, %v935, %v957
    %v961 = vrot.slane %v955, 7
    %v962 = vsel %vm959, 4, %v961
    %v963 = vrot.slane %v749, 1
    %v965 = vadd.f32 %v960, %v963
    %v966 = vperm.slane %v965, 4
    %v967 = vsel %vm753, %v966, 0.0
    %968 = vadd.xlane.f32.xlu0 %v967
    %v969 = vpop.xlane.xlu0 %968
    %v970 = vadd.f32 %v969, %v752
    %v972 = vrot.slane %v970, 7
    %vm974 = vcmp.gt.f32.partialorder %v970, %v972
    %v975 = vsel %vm974, %v970, %v972
    %v976 = vsel %vm974, 1, 0
    %v978 = vrot.slane %v975, 7
    %vm980 = vcmp.gt.f32.partialorder %v970, %v978
    %v981 = vsel %vm980, %v970, %v978
    %v982 = vrot.slane %v976, 7
    %v983 = vsel %vm980, 2, %v982
    %v985 = vrot.slane %v981, 7
    %vm987 = vcmp.gt.f32.partialorder %v970, %v985
    %v988 = vsel %vm987, %v970, %v985
    %v989 = vrot.slane %v983, 7
    %v990 = vsel %vm987, 3, %v989
    %v992 = vrot.slane %v988, 7
    %vm994 = vcmp.gt.f32.partialorder %v970, %v992
    %v995 = vsel %vm994, %v970, %v992
    %v996 = vrot.slane %v990, 7
    %v997 = vsel %vm994, 4, %v996
    %v998 = vrot.slane %v749, 2
    %v1000 = vadd.f32 %v995, %v998
    %v1001 = vperm.slane %v1000, 4
    %v1002 = vsel %vm753, %v1001, 0.0
    %1003 = vadd.xlane.f32.xlu0 %v1002
    %v1004 = vpop.xlane.xlu0 %1003
    %v1005 = vadd.f32 %v1004, %v752
    %v1007 = vrot.slane %v1005, 7
    %vm1009 = vcmp.gt.f32.partialorder %v1005, %v1007
    %v1010 = vsel %vm1009, %v1005, %v1007
    %v1011 = vsel %vm1009, 1, 0
    %v1013 = vrot.slane %v1010, 7
    %vm1015 = vcmp.gt.f32.partialorder %v1005, %v1013
    %v1016 = vsel %vm1015, %v1005, %v1013
    %v1017 = vrot.slane %v1011, 7
    %v1018 = vsel %vm1015, 2, %v1017
    %v1020 = vrot.slane %v1016, 7
    %vm1022 = vcmp.gt.f32.partialorder %v1005, %v1020
    %v1023 = vsel %vm1022, %v1005, %v1020
    %v1024 = vrot.slane %v1018, 7
    %v1025 = vsel %vm1022, 3, %v1024
    %v1027 = vrot.slane %v1023, 7
    %vm1029 = vcmp.gt.f32.partialorder %v1005, %v1027
    %v1030 = vsel %vm1029, %v1005, %v1027
    %v1031 = vrot.slane %v1025, 7
    %v1032 = vsel %vm1029, 4, %v1031
    %v1033 = vrot.slane %v749, 3
    %v1035 = vadd.f32 %v1030, %v1033
    %v1036 = vld [vmem:[%s9] sm:$0x1]
    %v1038 = vperm.slane %v1036, 0
    %v1040 = vadd.f32 %v1035, %v1038
    %vm1041 = vcmask 1044484
    %v1042 = vsel %vm1041, %v1040, -inf
    %1043 = vmax.xlane.f32.xlu0 %v1042
    %v1044 = vpop.xlane.xlu0 %1043
    %vm1045 = vcmask 4100
    %1046 = vst.msk [vmem:[#allocation4 - $0x4] sm:$0x10] %vm1045, %v1044
    %v1048 = vrot.slane %v1040, 4
    %vm1050 = vcmask 1040384
    %v1051 = vsel %vm1050, %v1048, -inf
    %1052 = vmax.index.xlane.f32.xlu0 %v1051
    %v1053 = vpop.xlane.xlu0 %1052
    %vm1054 = vcmp.eq.s32.totalorder %v82, %v1053
    %v1055 = vcvt.s32.f32 %v1032
    %v1057 = vrot.slane %v1055, 4
    %v1059 = vsel %vm1054, %v1057, 0.0
    %v1060 = vsel %vm1050, %v1059, 0.0
    %1061 = vadd.xlane.f32.xlu0 %v1060
    %v1062 = vpop.xlane.xlu0 %1061
    %v1063 = vcvt.f32.s32.to.zero.pseudo %v1062
    %vm1064 = vcmp.eq.s32.totalorder %v82, %v1063
    %v1065 = vcvt.s32.f32 %v997
    %v1067 = vrot.slane %v1065, 4
    %v1069 = vsel %vm1064, %v1067, 0.0
    %v1070 = vsel %vm1050, %v1069, 0.0
    %1071 = vadd.xlane.f32.xlu0 %v1070
    %v1072 = vpop.xlane.xlu0 %1071
    %v1073 = vcvt.f32.s32.to.zero.pseudo %v1072
    %vm1074 = vcmp.eq.s32.totalorder %v82, %v1073
    %v1075 = vcvt.s32.f32 %v962
    %v1077 = vrot.slane %v1075, 4
    %v1079 = vsel %vm1074, %v1077, 0.0
    %v1080 = vsel %vm1050, %v1079, 0.0
    %1081 = vadd.xlane.f32.xlu0 %v1080
    %v1082 = vpop.xlane.xlu0 %1081
    %v1083 = vcvt.f32.s32.to.zero.pseudo %v1082
    %vm1084 = vcmp.eq.s32.totalorder %v82, %v1083
    %v1085 = vcvt.s32.f32 %v929
    %v1087 = vrot.slane %v1085, 4
    %v1089 = vsel %vm1084, %v1087, 0.0
    %v1090 = vsel %vm1050, %v1089, 0.0
    %1091 = vadd.xlane.f32.xlu0 %v1090
    %v1092 = vpop.xlane.xlu0 %1091
    %v1093 = vcvt.f32.s32.to.zero.pseudo %v1092
    %vm1094 = vcmp.eq.s32.totalorder %v82, %v1093
    %v1095 = vcvt.s32.f32 %v894
    %v1097 = vrot.slane %v1095, 4
    %v1099 = vsel %vm1094, %v1097, 0.0
    %v1100 = vsel %vm1050, %v1099, 0.0
    %1101 = vadd.xlane.f32.xlu0 %v1100
    %v1102 = vpop.xlane.xlu0 %1101
    %v1103 = vcvt.f32.s32.to.zero.pseudo %v1102
    %vm1104 = vcmp.eq.s32.totalorder %v82, %v1103
    %v1105 = vcvt.s32.f32 %v859
    %v1107 = vrot.slane %v1105, 4
    %v1109 = vsel %vm1104, %v1107, 0.0
    %v1110 = vsel %vm1050, %v1109, 0.0
    %1111 = vadd.xlane.f32.xlu0 %v1110
    %v1112 = vpop.xlane.xlu0 %1111
    %v1113 = vcvt.f32.s32.to.zero.pseudo %v1112
    %vm1114 = vcmp.eq.s32.totalorder %v82, %v1113
    %v1115 = vcvt.s32.f32 %v824
    %v1117 = vrot.slane %v1115, 4
    %v1119 = vsel %vm1114, %v1117, 0.0
    %v1120 = vsel %vm1050, %v1119, 0.0
    %1121 = vadd.xlane.f32.xlu0 %v1120
    %v1122 = vpop.xlane.xlu0 %1121
    %v1123 = vcvt.f32.s32.to.zero.pseudo %v1122
    %vm1124 = vcmp.eq.s32.totalorder %v82, %v1123
    %v1125 = vcvt.s32.f32 %v788
    %v1127 = vrot.slane %v1125, 4
    %v1129 = vsel %vm1124, %v1127, 0.0
    %v1130 = vsel %vm1050, %v1129, 0.0
    %1131 = vadd.xlane.f32.xlu0 %v1130
    %v1132 = vpop.xlane.xlu0 %1131
    %v1133 = vcvt.f32.s32.to.zero.pseudo %v1132
    %vm1134 = vcmp.eq.s32.totalorder %v82, 0
    %v1135 = vsel %vm1134, %v1123, 0
    %vm1136 = vcmp.eq.s32.totalorder %v82, 1
    %v1137 = vsel %vm1136, %v1113, %v1135
    %vm1138 = vcmp.eq.s32.totalorder %v82, 2
    %v1139 = vsel %vm1138, %v1103, %v1137
    %v1140 = vsel %vm754, %v1093, %v1139
    %vm1141 = vcmp.eq.s32.totalorder %v82, 4
    %v1142 = vsel %vm1141, %v1083, %v1140
    %vm1143 = vcmp.eq.s32.totalorder %v82, 5
    %v1144 = vsel %vm1143, %v1073, %v1142
    %vm1145 = vcmp.eq.s32.totalorder %v82, 6
    %v1146 = vsel %vm1145, %v1063, %v1144
    %vm1147 = vcmp.eq.s32.totalorder %v82, 7
    %v1148 = vsel %vm1147, %v1053, %v1146
    %vm1149 = vcmp.eq.s32.totalorder %v82, 8
    %v1150 = vsel %vm1149, %v1133, %v1148
    %1151 = vst [vmem:[#allocation6] sm:$0x1] %v1150
    // Predicated region
    $region42: #{forward.1} parent=1 // pred_check
      _
    $region43: #{forward.1} parent=1 // pred_check_branch
      %1153 = sbr.rel (0) target = $region45
    $region44: #{forward.1} parent=1 // pred_region
      %1155 = vsyncadd [#allocation3], 0
      %s1157 = sshll.u32 [#allocation2], 4
      %s1158 = int_to_ptr.vmem [resolvable:$true] %s1157
      %s1159 = sshll.u32 %s10, 4
      %s1160 = int_to_ptr.hbm [resolvable:$true] %s1159
      %1162 = dma.vmem_to_hbm [thread:$0]  %s1158, 128, %s1160, [#allocation3]
    $region45: #{forward.1} parent=1 // pred_fallthru
      _
    // Predicated region
    $region46: #{forward.1} parent=1 // pred_check
      _
    $region47: #{forward.1} parent=1 // pred_check_branch
      %1164 = sbr.rel (0) target = $region49
    $region48: #{forward.1} parent=1 // pred_region
      %1166 = vsyncadd [#allocation5], 0
      %s1168 = sshll.u32 [#allocation4], 4
      %s1169 = int_to_ptr.vmem [resolvable:$true] %s1168
      %s1170 = sshll.u32 %s11, 4
      %s1171 = int_to_ptr.hbm [resolvable:$true] %s1170
      %1173 = dma.vmem_to_hbm [thread:$0]  %s1169, 16, %s1171, [#allocation5]
    $region49: #{forward.1} parent=1 // pred_fallthru
      _
    // Predicated region
    $region50: #{forward.1} parent=1 // pred_check
      _
    $region51: #{forward.1} parent=1 // pred_check_branch
      %1175 = sbr.rel (0) target = $region53
    $region52: #{forward.1} parent=1 // pred_region
      %1177 = vsyncadd [#allocation5], 0
      %s1179 = sshll.u32 [#allocation6], 4
      %s1180 = int_to_ptr.vmem [resolvable:$true] %s1179
      %s1181 = sshll.u32 %s12, 4
      %s1182 = int_to_ptr.hbm [resolvable:$true] %s1181
      %1184 = dma.vmem_to_hbm [thread:$0]  %s1180, 16, %s1182, [#allocation5]
    $region53: #{forward.1} parent=1 // pred_fallthru
      _
    // Predicated region
    $region54: #{forward.1} parent=1 // pred_check
      _
    $region55: #{forward.1} parent=1 // pred_check_branch
      %1186 = sbr.rel (0) target = $region57
    $region56: #{forward.1} parent=1 // pred_region
      %1188 = dma.done [#allocation3], 128
    $region57: #{forward.1} parent=1 // pred_fallthru
      _
    // Predicated region
    $region58: #{forward.1} parent=1 // pred_check
      _
    $region59: #{forward.1} parent=1 // pred_check_branch
      %1190 = sbr.rel (0) target = $region61
    $region60: #{forward.1} parent=1 // pred_region
      %1192 = dma.done [#allocation5], 16
    $region61: #{forward.1} parent=1 // pred_fallthru
      _
    // Predicated region
    $region62: #{forward.1} parent=1 // pred_check
      _
    $region63: #{forward.1} parent=1 // pred_check_branch
      %1194 = sbr.rel (0) target = $region65
    $region64: #{forward.1} parent=1 // pred_region
      %1196 = dma.done [#allocation5], 16
    $region65: #{forward.1} parent=1 // pred_fallthru
      _
    %1197 = vsyncpa [#allocation3], 1
    %1198 = vsyncpa [#allocation5], 1

</llo_original>
